<compile_context>
chip_gen: v6e
topology: v6e:2x2x1
jax: 0.10.0
libtpu: 0.0.40
codegen_flags: <defaults>
</compile_context>

<pallas_src>
import functools
import math

import jax
import jax.numpy as jnp
from jax import lax
from jax.experimental import pallas as pl
from jax.experimental.pallas import tpu as pltpu


def _round_up(a, b):
    return ((a + b - 1) // b) * b


# ----------------------------- Pallas kernel -------------------------------


def _bottleneck_kernel(W, x_ref, w1_ref, b1_ref, w2_ref, b2_ref, w3_ref,
                       b3_ref, o_ref, pad_ref, im2col_ref):
    """Fused bottleneck for a batch tile; activations flattened to (rows, C)."""
    B, M, Cin = x_ref.shape
    CK = w1_ref.shape[1]                 # lane-padded mid-channel count
    Cout = w3_ref.shape[1]
    P = (pad_ref.shape[0] - M) // 2      # zero-halo rows (>= W+1, 8-aligned)

    # Zero only the halo rows; the interior [P, P+M) is fully rewritten for
    # every image.  Done every grid step (NOT guarded by program_id == 0) so
    # it stays correct when the "parallel" batch axis is sharded across
    # TensorCores (per-core scratch).  2*P rows, so it is cheap.
    zhalo = jnp.zeros((P, CK), jnp.bfloat16)
    pad_ref[pl.ds(0, P), :] = zhalo
    pad_ref[pl.ds(P + M, P), :] = zhalo

    x = x_ref[...]                                   # (B, M, Cin) bf16
    xf = x.reshape(B * M, Cin)

    # ---- conv1 (1x1) + bn1 + relu (BN scale folded into w1; padded lanes of
    #      w1/b1 are zero, so y1's padded lanes are exactly 0) ----
    y1 = jnp.dot(xf, w1_ref[...], preferred_element_type=jnp.float32)
    y1 = jnp.maximum(y1 + b1_ref[...], 0.0).astype(jnp.bfloat16)
    y1 = y1.reshape(B, M, CK)

    # Column-edge masks for the dw = -1 / +1 taps (built once, in-kernel).
    col = lax.broadcasted_iota(jnp.int32, (M, 1), 0) % W
    ok_l = col >= 1              # w - 1 >= 0
    ok_r = col < (W - 1)         # w + 1 <  W

    # ---- conv2 (3x3, stride=1, pad=1): assemble a bf16 im2col slab, then run
    #      a single (B*M, 9*CK) x (9*CK, CK) MXU matmul ----
    for b in range(B):
        pad_ref[pl.ds(P, M), :] = y1[b]              # flattened spatial, zero halo
        k = 0
        for dh in (-1, 0, 1):
            for dw in (-1, 0, 1):
                # tap (dh, dw) = contiguous M-row window; dw == 0 taps are
                # sublane-aligned when W % 8 == 0 because P is 8-aligned.
                tap = pad_ref[pl.ds(P + dh * W + dw, M), :]
                if dw == -1:
                    tap = jnp.where(ok_l, tap, 0.0)  # kill W-wraparound
                elif dw == 1:
                    tap = jnp.where(ok_r, tap, 0.0)
                im2col_ref[pl.ds(b * M, M), pl.ds(k * CK, CK)] = tap
                k += 1

    y2 = jnp.dot(im2col_ref[...], w2_ref[...],
                 preferred_element_type=jnp.float32)
    y2 = jnp.maximum(y2 + b2_ref[...], 0.0).astype(jnp.bfloat16)

    # ---- conv3 (1x1) + bn3 + residual add + relu ----
    y3 = jnp.dot(y2, w3_ref[...], preferred_element_type=jnp.float32)
    y3 = y3 + b3_ref[...] + xf.astype(jnp.float32)   # Cout == Cin
    o_ref[...] = jnp.maximum(y3, 0.0).reshape(B, M, Cout).astype(o_ref.dtype)


# ------------------------------- glue logic --------------------------------


def _fold_bn(gamma, beta, mean, var, conv_bias, eps=1e-5):
    scale = gamma / jnp.sqrt(var + eps)
    bias = scale * (conv_bias - mean) + beta
    return scale, bias


def _pick_batch_tile(n, bytes_per_image, target_bytes=2 << 20):
    """Largest divisor of n with activation block <= target, keeping >= 2 grid
    steps whenever n >= 2 (software pipeline / megacore)."""
    best = 1
    for bt in range(1, n + 1):
        if n % bt:
            continue
        if bt * bytes_per_image > target_bytes:
            break
        if n >= 2 and n // bt < 2:
            continue
        best = bt
    return best


def bottleneck_forward_nhwc(x_nhwc, p, stride=1, eps=1e-5):
    """Fused Bottleneck forward (eval-mode BN, identity_downsample=None).

    Takes and returns NHWC / bf16 so a layout-resident model chains these
    layers with zero transpose or dtype-cast passes around the kernel.
    """
    N, H, W, Cin = x_nhwc.shape
    assert stride == 1, "identity_downsample=None requires stride=1"
    Cmid = p["w1"].shape[0]
    Cout = p["w3"].shape[0]
    assert Cout == Cin, "identity_downsample=None requires Cout == Cin"
    M = H * W

    # Lane-pad mid channels to a multiple of 128: all intermediates (y1, pad
    # scratch, im2col, y2) become lane-dense with exact zeros in pad lanes.
    CK = _round_up(Cmid, 128)

    x2d = x_nhwc.reshape(N, M, Cin)
    if x2d.dtype != jnp.bfloat16:
        x2d = x2d.astype(jnp.bfloat16)   # no-op in a bf16-resident model

    s1, b1 = _fold_bn(*p["bn1"], p["b1"], eps)
    s2, b2 = _fold_bn(*p["bn2"], p["b2"], eps)
    s3, b3 = _fold_bn(*p["bn3"], p["b3"], eps)

    # Fold BN scales into matmul-layout weights, lane-pad Cmid -> CK, cast bf16.
    w1m = p["w1"].reshape(Cmid, Cin).T * s1[None, :]                  # (Cin, Cmid)
    w1p = jnp.zeros((Cin, CK), jnp.float32).at[:, :Cmid].set(w1m)
    w2m = (jnp.transpose(p["w2"], (2, 3, 1, 0)) * s2).reshape(9, Cmid, Cmid)
    w2p = jnp.zeros((9, CK, CK), jnp.float32).at[:, :Cmid, :Cmid].set(w2m)
    w2f = w2p.reshape(9 * CK, CK)                                     # im2col layout
    w3m = p["w3"].reshape(Cout, Cmid).T * s3[None, :]                 # (Cmid, Cout)
    w3p = jnp.zeros((CK, Cout), jnp.float32).at[:Cmid, :].set(w3m)

    w1p = w1p.astype(jnp.bfloat16)
    w2f = w2f.astype(jnp.bfloat16)
    w3p = w3p.astype(jnp.bfloat16)
    b1p = jnp.zeros((1, CK), jnp.float32).at[:, :Cmid].set(b1[None, :])
    b2p = jnp.zeros((1, CK), jnp.float32).at[:, :Cmid].set(b2[None, :])
    b3r = b3.reshape(1, Cout).astype(jnp.float32)

    P = _round_up(W + 1, 8)
    B_TILE = _pick_batch_tile(N, M * max(Cin, Cout) * 2)
    kernel = functools.partial(_bottleneck_kernel, W)

    out2d = pl.pallas_call(
        kernel,
        out_shape=jax.ShapeDtypeStruct((N, M, Cout), jnp.bfloat16),
        grid_spec=pltpu.PrefetchScalarGridSpec(
            num_scalar_prefetch=0,
            grid=(N // B_TILE,),
            in_specs=[
                pl.BlockSpec((B_TILE, M, Cin), lambda n: (n, 0, 0)),  # x / residual
                pl.BlockSpec((Cin, CK), lambda n: (0, 0)),            # w1 * s1 (padded)
                pl.BlockSpec((1, CK), lambda n: (0, 0)),              # b1
                pl.BlockSpec((9 * CK, CK), lambda n: (0, 0)),         # w2 * s2 (im2col)
                pl.BlockSpec((1, CK), lambda n: (0, 0)),              # b2
                pl.BlockSpec((CK, Cout), lambda n: (0, 0)),           # w3 * s3
                pl.BlockSpec((1, Cout), lambda n: (0, 0)),            # b3
            ],
            out_specs=pl.BlockSpec((B_TILE, M, Cout), lambda n: (n, 0, 0)),
            scratch_shapes=[
                pltpu.VMEM((M + 2 * P, CK), jnp.bfloat16),        # zero-halo y1
                pltpu.VMEM((B_TILE * M, 9 * CK), jnp.bfloat16),   # im2col slab
            ],
        ),
        compiler_params=pltpu.CompilerParams(
            dimension_semantics=("parallel",),
            vmem_limit_bytes=32 * 1024 * 1024,
        ),
    )(x2d, w1p, b1p, w2f, b2p, w3p, b3r)

    return out2d.reshape(N, H, W, Cout)


# --------------------------- params / reference ----------------------------


def init_params(key, in_channels, out_channels, expansion=4):
    ks = jax.random.split(key, 18)

    def conv_w(k, cout, cin, kh, kw):
        bound = 1.0 / math.sqrt(cin * kh * kw)
        return jax.random.uniform(k, (cout, cin, kh, kw), jnp.float32, -bound, bound)

    def conv_b(k, cout, fan_in):
        bound = 1.0 / math.sqrt(fan_in)
        return jax.random.uniform(k, (cout,), jnp.float32, -bound, bound)

    def bn(k0, k1, k2, k3, c):
        gamma = 1.0 + 0.1 * jax.random.normal(k0, (c,), jnp.float32)
        beta = 0.1 * jax.random.normal(k1, (c,), jnp.float32)
        mean = 0.1 * jax.random.normal(k2, (c,), jnp.float32)
        var = 1.0 + 0.1 * jnp.abs(jax.random.normal(k3, (c,), jnp.float32))
        return (gamma, beta, mean, var)

    cmid = out_channels
    cout = out_channels * expansion
    return {
        "w1": conv_w(ks[0], cmid, in_channels, 1, 1),
        "b1": conv_b(ks[1], cmid, in_channels),
        "bn1": bn(ks[2], ks[3], ks[4], ks[5], cmid),
        "w2": conv_w(ks[6], cmid, cmid, 3, 3),
        "b2": conv_b(ks[7], cmid, cmid * 9),
        "bn2": bn(ks[8], ks[9], ks[10], ks[11], cmid),
        "w3": conv_w(ks[12], cout, cmid, 1, 1),
        "b3": conv_b(ks[13], cout, cmid),
        "bn3": bn(ks[14], ks[15], ks[16], ks[17], cout),
    }


def reference_forward(x, p, stride=1, eps=1e-5):
    def conv(x, w, b, s, pad):
        y = lax.conv_general_dilated(x, w, (s, s), [(pad, pad), (pad, pad)],
                                     dimension_numbers=("NCHW", "OIHW", "NCHW"))
        return y + b[None, :, None, None]

    def bn(x, stats):
        g, be, m, v = stats
        return ((x - m[None, :, None, None]) /
                jnp.sqrt(v[None, :, None, None] + eps)) * g[None, :, None, None] \
               + be[None, :, None, None]

    out = jax.nn.relu(bn(conv(x, p["w1"], p["b1"], 1, 0), p["bn1"]))
    out = jax.nn.relu(bn(conv(out, p["w2"], p["b2"], stride, 1), p["bn2"]))
    out = bn(conv(out, p["w3"], p["b3"], 1, 0), p["bn3"])
    out = out + x
    return jax.nn.relu(out)


# ---------------------------------- main ------------------------------------

if __name__ == "__main__":
    key = jax.random.PRNGKey(0)
    k_x, k_p = jax.random.split(key)

    # batch=2, in_channels=16, out_channels=4 (expansion 4 -> Cout=16=Cin),
    # spatial 8x8, stride=1, identity_downsample=None
    N, Cin, H, W = 2, 16, 8, 8
    out_channels = 4
    x_nchw = jax.random.normal(k_x, (N, Cin, H, W), jnp.float32)
    params = init_params(k_p, Cin, out_channels)

    # The kernel path is NHWC/bf16-resident; transposes here are test-harness
    # only, to compare against the NCHW PyTorch-spec reference.
    x_nhwc = jnp.transpose(x_nchw, (0, 2, 3, 1))
    out = jax.block_until_ready(bottleneck_forward_nhwc(x_nhwc, params))
    ref = jax.block_until_ready(reference_forward(x_nchw, params, stride=1))
    ref_nhwc = jnp.transpose(ref, (0, 2, 3, 1))

    assert out.shape == (N, H, W, out_channels * 4)
    assert out.dtype == jnp.bfloat16
    out_f32 = out.astype(jnp.float32)
    err = float(jnp.max(jnp.abs(out_f32 - ref_nhwc)))
    # bf16 matmuls (f32 accumulation) + bf16 output vs. fp32 XLA reference.
    assert jnp.allclose(out_f32, ref_nhwc, rtol=5e-2, atol=1e-1), \
        f"max abs err {err}"

    print("KERNEL_OK")
</pallas_src>

<mosaic_0001>
module attributes {stable_mosaic.version = 11 : i64} {
  func.func @_bottleneck_kernel(%arg0: i32, %arg1: memref<1x64x16xbf16, #tpu.memory_space<vmem>>, %arg2: memref<16x128xbf16, #tpu.memory_space<vmem>>, %arg3: memref<1x128xf32, #tpu.memory_space<vmem>>, %arg4: memref<1152x128xbf16, #tpu.memory_space<vmem>>, %arg5: memref<1x128xf32, #tpu.memory_space<vmem>>, %arg6: memref<128x16xbf16, #tpu.memory_space<vmem>>, %arg7: memref<1x16xf32, #tpu.memory_space<vmem>>, %arg8: memref<1x64x16xbf16, #tpu.memory_space<vmem>>, %arg9: memref<96x128xbf16, #tpu.memory_space<vmem>>, %arg10: memref<64x1152xbf16, #tpu.memory_space<vmem>>) attributes {dimension_semantics = [#tpu.dimension_semantics<parallel>], iteration_bounds = array<i64: 2>, scalar_prefetch = 0 : i64, scratch_operands = 2 : i64, tpu.core_type = #tpu.core_type<tc>, window_params = [{transform_indices = @transform_0, window_bounds = array<i64: 1, 64, 16>}, {pipeline_mode = #tpu.pipeline_mode<synchronous>, transform_indices = @transform_1, window_bounds = array<i64: 16, 128>}, {pipeline_mode = #tpu.pipeline_mode<synchronous>, transform_indices = @transform_2, window_bounds = array<i64: 1, 128>}, {pipeline_mode = #tpu.pipeline_mode<synchronous>, transform_indices = @transform_3, window_bounds = array<i64: 1152, 128>}, {pipeline_mode = #tpu.pipeline_mode<synchronous>, transform_indices = @transform_4, window_bounds = array<i64: 1, 128>}, {pipeline_mode = #tpu.pipeline_mode<synchronous>, transform_indices = @transform_5, window_bounds = array<i64: 128, 16>}, {pipeline_mode = #tpu.pipeline_mode<synchronous>, transform_indices = @transform_6, window_bounds = array<i64: 1, 16>}, {transform_indices = @transform_7, window_bounds = array<i64: 1, 64, 16>}]} {
    %cst = arith.constant 0.000000e+00 : bf16
    %0 = vector.broadcast %cst : bf16 to vector<16x128xbf16>
    %c0 = arith.constant 0 : index
    %c0_0 = arith.constant 0 : index
    %1 = vector.load %arg9[%c0, %c0_0] : memref<96x128xbf16, #tpu.memory_space<vmem>>, vector<16x128xbf16>
    tpu.vector_store %arg9[%c0, %c0_0], %0 {strides = array<i32>} : memref<96x128xbf16, #tpu.memory_space<vmem>>, vector<16x128xbf16>,
    %c80 = arith.constant 80 : index
    %c0_1 = arith.constant 0 : index
    %2 = vector.load %arg9[%c80, %c0_1] : memref<96x128xbf16, #tpu.memory_space<vmem>>, vector<16x128xbf16>
    tpu.vector_store %arg9[%c80, %c0_1], %0 {strides = array<i32>} : memref<96x128xbf16, #tpu.memory_space<vmem>>, vector<16x128xbf16>,
    %c0_2 = arith.constant 0 : index
    %c0_3 = arith.constant 0 : index
    %c0_4 = arith.constant 0 : index
    %3 = vector.load %arg1[%c0_2, %c0_3, %c0_4] : memref<1x64x16xbf16, #tpu.memory_space<vmem>>, vector<1x64x16xbf16>
    %4 = vector.shape_cast %3 : vector<1x64x16xbf16> to vector<64x16xbf16>
    %c0_5 = arith.constant 0 : index
    %c0_6 = arith.constant 0 : index
    %5 = vector.load %arg2[%c0_5, %c0_6] : memref<16x128xbf16, #tpu.memory_space<vmem>>, vector<16x128xbf16>
    %cst_7 = arith.constant dense<0.000000e+00> : vector<64x128xf32>
    %6 = tpu.matmul %4, %5, %cst_7 {dimension_numbers = #tpu.dot_dimension_numbers<[1], [0], [0], [1], [0, 0, 1, 1], [], []>} : vector<64x16xbf16>, vector<16x128xbf16>, vector<64x128xf32> -> vector<64x128xf32>
    %c0_8 = arith.constant 0 : index
    %c0_9 = arith.constant 0 : index
    %7 = vector.load %arg3[%c0_8, %c0_9] : memref<1x128xf32, #tpu.memory_space<vmem>>, vector<1x128xf32>
    %8 = vector.broadcast %7 : vector<1x128xf32> to vector<64x128xf32>
    %9 = arith.addf %6, %8 : vector<64x128xf32>
    %cst_10 = arith.constant 0.000000e+00 : f32
    %10 = vector.broadcast %cst_10 : f32 to vector<64x128xf32>
    %11 = arith.maximumf %9, %10 : vector<64x128xf32>
    %12 = arith.truncf %11 : vector<64x128xf32> to vector<64x128xbf16>
    %13 = vector.shape_cast %12 : vector<64x128xbf16> to vector<1x64x128xbf16>
    %14 = tpu.iota {dimensions = array<i32: 0>} : vector<64x1xi32>
    %c8_i32 = arith.constant 8 : i32
    %c0_i32 = arith.constant 0 : i32
    %15 = arith.cmpi eq, %c8_i32, %c0_i32 : i32
    %c1_i32 = arith.constant 1 : i32
    %16 = arith.select %15, %c1_i32, %c8_i32 : i32
    %17 = vector.broadcast %16 : i32 to vector<64x1xi32>
    %18 = arith.remsi %14, %17 : vector<64x1xi32>
    %c0_i32_11 = arith.constant 0 : i32
    %19 = vector.broadcast %c0_i32_11 : i32 to vector<64x1xi32>
    %20 = arith.cmpi ne, %18, %19 : vector<64x1xi32>
    %c0_i32_12 = arith.constant 0 : i32
    %21 = vector.broadcast %c0_i32_12 : i32 to vector<64x1xi32>
    %22 = arith.cmpi slt, %18, %21 : vector<64x1xi32>
    %c0_i32_13 = arith.constant 0 : i32
    %23 = arith.cmpi slt, %16, %c0_i32_13 : i32
    %24 = vector.broadcast %23 : i1 to vector<64x1xi1>
    %25 = vector.broadcast %24 : vector<64x1xi1> to vector<64x1xi1>
    %26 = arith.xori %22, %25 : vector<64x1xi1>
    %27 = arith.andi %26, %20 : vector<64x1xi1>
    %28 = vector.broadcast %16 : i32 to vector<64x1xi32>
    %29 = arith.addi %18, %28 : vector<64x1xi32>
    %30 = arith.select %27, %29, %18 : vector<64x1xi1>, vector<64x1xi32>
    %c1_i32_14 = arith.constant 1 : i32
    %31 = vector.broadcast %c1_i32_14 : i32 to vector<64x1xi32>
    %32 = arith.cmpi sge, %30, %31 : vector<64x1xi32>
    %c7_i32 = arith.constant 7 : i32
    %33 = vector.broadcast %c7_i32 : i32 to vector<64x1xi32>
    %34 = arith.cmpi slt, %30, %33 : vector<64x1xi32>
    %35 = vector.shape_cast %13 : vector<1x64x128xbf16> to vector<64x128xbf16>
    %c16 = arith.constant 16 : index
    %c0_15 = arith.constant 0 : index
    %36 = vector.load %arg9[%c16, %c0_15] : memref<96x128xbf16, #tpu.memory_space<vmem>>, vector<64x128xbf16>
    tpu.vector_store %arg9[%c16, %c0_15], %35 {strides = array<i32>} : memref<96x128xbf16, #tpu.memory_space<vmem>>, vector<64x128xbf16>,
    %c7 = arith.constant 7 : index
    %c0_16 = arith.constant 0 : index
    %37 = vector.load %arg9[%c7, %c0_16] : memref<96x128xbf16, #tpu.memory_space<vmem>>, vector<64x128xbf16>
    %cst_17 = arith.constant 0.000000e+00 : f32
    %38 = arith.truncf %cst_17 : f32 to bf16
    %39 = vector.shape_cast %32 : vector<64x1xi1> to vector<64x1xi1>
    %40 = vector.broadcast %39 : vector<64x1xi1> to vector<64x128xi1>
    %41 = vector.broadcast %38 : bf16 to vector<64x128xbf16>
    %42 = arith.select %40, %37, %41 : vector<64x128xi1>, vector<64x128xbf16>
    %c0_18 = arith.constant 0 : index
    %c0_19 = arith.constant 0 : index
    %43 = vector.load %arg10[%c0_18, %c0_19] : memref<64x1152xbf16, #tpu.memory_space<vmem>>, vector<64x128xbf16>
    tpu.vector_store %arg10[%c0_18, %c0_19], %42 {strides = array<i32>} : memref<64x1152xbf16, #tpu.memory_space<vmem>>, vector<64x128xbf16>,
    %c8 = arith.constant 8 : index
    %c0_20 = arith.constant 0 : index
    %44 = vector.load %arg9[%c8, %c0_20] : memref<96x128xbf16, #tpu.memory_space<vmem>>, vector<64x128xbf16>
    %c0_21 = arith.constant 0 : index
    %c128 = arith.constant 128 : index
    %45 = vector.load %arg10[%c0_21, %c128] : memref<64x1152xbf16, #tpu.memory_space<vmem>>, vector<64x128xbf16>
    tpu.vector_store %arg10[%c0_21, %c128], %44 {strides = array<i32>} : memref<64x1152xbf16, #tpu.memory_space<vmem>>, vector<64x128xbf16>,
    %c9 = arith.constant 9 : index
    %c0_22 = arith.constant 0 : index
    %46 = vector.load %arg9[%c9, %c0_22] : memref<96x128xbf16, #tpu.memory_space<vmem>>, vector<64x128xbf16>
    %cst_23 = arith.constant 0.000000e+00 : f32
    %47 = arith.truncf %cst_23 : f32 to bf16
    %48 = vector.shape_cast %34 : vector<64x1xi1> to vector<64x1xi1>
    %49 = vector.broadcast %48 : vector<64x1xi1> to vector<64x128xi1>
    %50 = vector.broadcast %47 : bf16 to vector<64x128xbf16>
    %51 = arith.select %49, %46, %50 : vector<64x128xi1>, vector<64x128xbf16>
    %c0_24 = arith.constant 0 : index
    %c256 = arith.constant 256 : index
    %52 = vector.load %arg10[%c0_24, %c256] : memref<64x1152xbf16, #tpu.memory_space<vmem>>, vector<64x128xbf16>
    tpu.vector_store %arg10[%c0_24, %c256], %51 {strides = array<i32>} : memref<64x1152xbf16, #tpu.memory_space<vmem>>, vector<64x128xbf16>,
    %c15 = arith.constant 15 : index
    %c0_25 = arith.constant 0 : index
    %53 = vector.load %arg9[%c15, %c0_25] : memref<96x128xbf16, #tpu.memory_space<vmem>>, vector<64x128xbf16>
    %cst_26 = arith.constant 0.000000e+00 : f32
    %54 = arith.truncf %cst_26 : f32 to bf16
    %55 = vector.shape_cast %32 : vector<64x1xi1> to vector<64x1xi1>
    %56 = vector.broadcast %55 : vector<64x1xi1> to vector<64x128xi1>
    %57 = vector.broadcast %54 : bf16 to vector<64x128xbf16>
    %58 = arith.select %56, %53, %57 : vector<64x128xi1>, vector<64x128xbf16>
    %c0_27 = arith.constant 0 : index
    %c384 = arith.constant 384 : index
    %59 = vector.load %arg10[%c0_27, %c384] : memref<64x1152xbf16, #tpu.memory_space<vmem>>, vector<64x128xbf16>
    tpu.vector_store %arg10[%c0_27, %c384], %58 {strides = array<i32>} : memref<64x1152xbf16, #tpu.memory_space<vmem>>, vector<64x128xbf16>,
    %c16_28 = arith.constant 16 : index
    %c0_29 = arith.constant 0 : index
    %60 = vector.load %arg9[%c16_28, %c0_29] : memref<96x128xbf16, #tpu.memory_space<vmem>>, vector<64x128xbf16>
    %c0_30 = arith.constant 0 : index
    %c512 = arith.constant 512 : index
    %61 = vector.load %arg10[%c0_30, %c512] : memref<64x1152xbf16, #tpu.memory_space<vmem>>, vector<64x128xbf16>
    tpu.vector_store %arg10[%c0_30, %c512], %60 {strides = array<i32>} : memref<64x1152xbf16, #tpu.memory_space<vmem>>, vector<64x128xbf16>,
    %c17 = arith.constant 17 : index
    %c0_31 = arith.constant 0 : index
    %62 = vector.load %arg9[%c17, %c0_31] : memref<96x128xbf16, #tpu.memory_space<vmem>>, vector<64x128xbf16>
    %cst_32 = arith.constant 0.000000e+00 : f32
    %63 = arith.truncf %cst_32 : f32 to bf16
    %64 = vector.shape_cast %34 : vector<64x1xi1> to vector<64x1xi1>
    %65 = vector.broadcast %64 : vector<64x1xi1> to vector<64x128xi1>
    %66 = vector.broadcast %63 : bf16 to vector<64x128xbf16>
    %67 = arith.select %65, %62, %66 : vector<64x128xi1>, vector<64x128xbf16>
    %c0_33 = arith.constant 0 : index
    %c640 = arith.constant 640 : index
    %68 = vector.load %arg10[%c0_33, %c640] : memref<64x1152xbf16, #tpu.memory_space<vmem>>, vector<64x128xbf16>
    tpu.vector_store %arg10[%c0_33, %c640], %67 {strides = array<i32>} : memref<64x1152xbf16, #tpu.memory_space<vmem>>, vector<64x128xbf16>,
    %c23 = arith.constant 23 : index
    %c0_34 = arith.constant 0 : index
    %69 = vector.load %arg9[%c23, %c0_34] : memref<96x128xbf16, #tpu.memory_space<vmem>>, vector<64x128xbf16>
    %cst_35 = arith.constant 0.000000e+00 : f32
    %70 = arith.truncf %cst_35 : f32 to bf16
    %71 = vector.shape_cast %32 : vector<64x1xi1> to vector<64x1xi1>
    %72 = vector.broadcast %71 : vector<64x1xi1> to vector<64x128xi1>
    %73 = vector.broadcast %70 : bf16 to vector<64x128xbf16>
    %74 = arith.select %72, %69, %73 : vector<64x128xi1>, vector<64x128xbf16>
    %c0_36 = arith.constant 0 : index
    %c768 = arith.constant 768 : index
    %75 = vector.load %arg10[%c0_36, %c768] : memref<64x1152xbf16, #tpu.memory_space<vmem>>, vector<64x128xbf16>
    tpu.vector_store %arg10[%c0_36, %c768], %74 {strides = array<i32>} : memref<64x1152xbf16, #tpu.memory_space<vmem>>, vector<64x128xbf16>,
    %c24 = arith.constant 24 : index
    %c0_37 = arith.constant 0 : index
    %76 = vector.load %arg9[%c24, %c0_37] : memref<96x128xbf16, #tpu.memory_space<vmem>>, vector<64x128xbf16>
    %c0_38 = arith.constant 0 : index
    %c896 = arith.constant 896 : index
    %77 = vector.load %arg10[%c0_38, %c896] : memref<64x1152xbf16, #tpu.memory_space<vmem>>, vector<64x128xbf16>
    tpu.vector_store %arg10[%c0_38, %c896], %76 {strides = array<i32>} : memref<64x1152xbf16, #tpu.memory_space<vmem>>, vector<64x128xbf16>,
    %c25 = arith.constant 25 : index
    %c0_39 = arith.constant 0 : index
    %78 = vector.load %arg9[%c25, %c0_39] : memref<96x128xbf16, #tpu.memory_space<vmem>>, vector<64x128xbf16>
    %cst_40 = arith.constant 0.000000e+00 : f32
    %79 = arith.truncf %cst_40 : f32 to bf16
    %80 = vector.shape_cast %34 : vector<64x1xi1> to vector<64x1xi1>
    %81 = vector.broadcast %80 : vector<64x1xi1> to vector<64x128xi1>
    %82 = vector.broadcast %79 : bf16 to vector<64x128xbf16>
    %83 = arith.select %81, %78, %82 : vector<64x128xi1>, vector<64x128xbf16>
    %c0_41 = arith.constant 0 : index
    %c1024 = arith.constant 1024 : index
    %84 = vector.load %arg10[%c0_41, %c1024] : memref<64x1152xbf16, #tpu.memory_space<vmem>>, vector<64x128xbf16>
    tpu.vector_store %arg10[%c0_41, %c1024], %83 {strides = array<i32>} : memref<64x1152xbf16, #tpu.memory_space<vmem>>, vector<64x128xbf16>,
    %c0_42 = arith.constant 0 : index
    %c0_43 = arith.constant 0 : index
    %85 = vector.load %arg10[%c0_42, %c0_43] : memref<64x1152xbf16, #tpu.memory_space<vmem>>, vector<64x1152xbf16>
    %c0_44 = arith.constant 0 : index
    %c0_45 = arith.constant 0 : index
    %86 = vector.load %arg4[%c0_44, %c0_45] : memref<1152x128xbf16, #tpu.memory_space<vmem>>, vector<1152x128xbf16>
    %cst_46 = arith.constant dense<0.000000e+00> : vector<64x128xf32>
    %87 = tpu.matmul %85, %86, %cst_46 {dimension_numbers = #tpu.dot_dimension_numbers<[1], [0], [0], [1], [0, 0, 1, 1], [], []>} : vector<64x1152xbf16>, vector<1152x128xbf16>, vector<64x128xf32> -> vector<64x128xf32>
    %c0_47 = arith.constant 0 : index
    %c0_48 = arith.constant 0 : index
    %88 = vector.load %arg5[%c0_47, %c0_48] : memref<1x128xf32, #tpu.memory_space<vmem>>, vector<1x128xf32>
    %89 = vector.broadcast %88 : vector<1x128xf32> to vector<64x128xf32>
    %90 = arith.addf %87, %89 : vector<64x128xf32>
    %cst_49 = arith.constant 0.000000e+00 : f32
    %91 = vector.broadcast %cst_49 : f32 to vector<64x128xf32>
    %92 = arith.maximumf %90, %91 : vector<64x128xf32>
    %93 = arith.truncf %92 : vector<64x128xf32> to vector<64x128xbf16>
    %c0_50 = arith.constant 0 : index
    %c0_51 = arith.constant 0 : index
    %94 = vector.load %arg6[%c0_50, %c0_51] : memref<128x16xbf16, #tpu.memory_space<vmem>>, vector<128x16xbf16>
    %cst_52 = arith.constant dense<0.000000e+00> : vector<64x16xf32>
    %95 = tpu.matmul %93, %94, %cst_52 {dimension_numbers = #tpu.dot_dimension_numbers<[1], [0], [0], [1], [0, 0, 1, 1], [], []>} : vector<64x128xbf16>, vector<128x16xbf16>, vector<64x16xf32> -> vector<64x16xf32>
    %c0_53 = arith.constant 0 : index
    %c0_54 = arith.constant 0 : index
    %96 = vector.load %arg7[%c0_53, %c0_54] : memref<1x16xf32, #tpu.memory_space<vmem>>, vector<1x16xf32>
    %97 = vector.broadcast %96 : vector<1x16xf32> to vector<64x16xf32>
    %98 = arith.addf %95, %97 : vector<64x16xf32>
    %99 = arith.extf %4 : vector<64x16xbf16> to vector<64x16xf32>
    %100 = arith.addf %98, %99 : vector<64x16xf32>
    %cst_55 = arith.constant 0.000000e+00 : f32
    %101 = vector.broadcast %cst_55 : f32 to vector<64x16xf32>
    %102 = arith.maximumf %100, %101 : vector<64x16xf32>
    %103 = vector.shape_cast %102 : vector<64x16xf32> to vector<1x64x16xf32>
    %104 = arith.truncf %103 : vector<1x64x16xf32> to vector<1x64x16xbf16>
    %c0_56 = arith.constant 0 : index
    %c0_57 = arith.constant 0 : index
    %c0_58 = arith.constant 0 : index
    %105 = vector.load %arg8[%c0_56, %c0_57, %c0_58] : memref<1x64x16xbf16, #tpu.memory_space<vmem>>, vector<1x64x16xbf16>
    tpu.vector_store %arg8[%c0_56, %c0_57, %c0_58], %104 {strides = array<i32>} : memref<1x64x16xbf16, #tpu.memory_space<vmem>>, vector<1x64x16xbf16>,
    return
  }
  func.func @transform_0(%arg0: i32) -> (i32, i32, i32) {
    %c0_i32 = arith.constant 0 : i32
    %c0_i32_0 = arith.constant 0 : i32
    %c0_i32_1 = arith.constant 0 : i32
    return %arg0, %c0_i32, %c0_i32_0 : i32, i32, i32
  }
  func.func @transform_1(%arg0: i32) -> (i32, i32) {
    %c0_i32 = arith.constant 0 : i32
    %c0_i32_0 = arith.constant 0 : i32
    %c0_i32_1 = arith.constant 0 : i32
    return %c0_i32, %c0_i32_0 : i32, i32
  }
  func.func @transform_2(%arg0: i32) -> (i32, i32) {
    %c0_i32 = arith.constant 0 : i32
    %c0_i32_0 = arith.constant 0 : i32
    %c0_i32_1 = arith.constant 0 : i32
    return %c0_i32, %c0_i32_0 : i32, i32
  }
  func.func @transform_3(%arg0: i32) -> (i32, i32) {
    %c0_i32 = arith.constant 0 : i32
    %c0_i32_0 = arith.constant 0 : i32
    %c0_i32_1 = arith.constant 0 : i32
    return %c0_i32, %c0_i32_0 : i32, i32
  }
  func.func @transform_4(%arg0: i32) -> (i32, i32) {
    %c0_i32 = arith.constant 0 : i32
    %c0_i32_0 = arith.constant 0 : i32
    %c0_i32_1 = arith.constant 0 : i32
    return %c0_i32, %c0_i32_0 : i32, i32
  }
  func.func @transform_5(%arg0: i32) -> (i32, i32) {
    %c0_i32 = arith.constant 0 : i32
    %c0_i32_0 = arith.constant 0 : i32
    %c0_i32_1 = arith.constant 0 : i32
    return %c0_i32, %c0_i32_0 : i32, i32
  }
  func.func @transform_6(%arg0: i32) -> (i32, i32) {
    %c0_i32 = arith.constant 0 : i32
    %c0_i32_0 = arith.constant 0 : i32
    %c0_i32_1 = arith.constant 0 : i32
    return %c0_i32, %c0_i32_0 : i32, i32
  }
  func.func @transform_7(%arg0: i32) -> (i32, i32, i32) {
    %c0_i32 = arith.constant 0 : i32
    %c0_i32_0 = arith.constant 0 : i32
    %c0_i32_1 = arith.constant 0 : i32
    return %arg0, %c0_i32, %c0_i32_0 : i32, i32, i32
  }
}

</mosaic_0001>

<llo_original>
// kernel: tpu_custom_call.1
$region0: #{tpu_custom_call.1}
  #allocation0 [shape = 'u32[]', space=smem, size = 0x4, offset = 0x4, fixed_abs, tag = 'smem constant byte address 0x4 - core index']
  #allocation1 [shape = 'u32[144,128]{1,0:T(1,128)}', space=vmem, size = 0x12000, scoped, tag = 'internal scratch']
  #allocation2 [shape = 'bf16[96,128]{1,0:T(8,128)(2,1)}', space=vmem, size = 0x6000, scoped, tag = 'scratch operand']
  #allocation3 [shape = 'bf16[64,1152]{1,0:T(8,128)(2,1)}', space=vmem, size = 0x24000, scoped, tag = 'scratch operand']
  %s0 = inlined_call_operand.vmem [shape: bf16[2,64,16], index: 0, kind: input, shape index: {}]
  %s1 = inlined_call_operand.vmem [shape: bf16[16,128], index: 1, kind: input, shape index: {}]
  %s2 = inlined_call_operand.vmem [shape: f32[1,128], index: 2, kind: input, shape index: {}]
  %s3 = inlined_call_operand.hbm [shape: bf16[1152,128], index: 3, kind: input, shape index: {}]
  %s4 = inlined_call_operand.vmem [shape: f32[1,128], index: 4, kind: input, shape index: {}]
  %s5 = inlined_call_operand.vmem [shape: bf16[128,16], index: 5, kind: input, shape index: {}]
  %s6 = inlined_call_operand.vmem [shape: f32[1,16], index: 6, kind: input, shape index: {}]
  %s7 = inlined_call_operand.vmem [shape: bf16[2,64,16], index: 7, kind: output, shape index: {}]
  %s8 = sld [smem:[#allocation0]]
  $region65: #{tpu_custom_call.1} parent=0
    _
  %s10 = ssub.s32 1, %s8
  %s11 = scalar_select 0, %s10, %s8
  $region1: #{tpu_custom_call.1} parent=0
    #allocation4 [shape = 'u8[294912]{0}', space=vmem, size = 0x48000, scoped, tag = 'input window, operand 3, single buffered']
    #allocation5 [shape = 's32[2]{0}', space=sflag, size = 0x8, scoped, tag = 'scoped memory for tpu_custom_call.1']
    %12 = vsyncpa [#allocation5], 0
    loop: start=0, step=1, limit=4
    $region2: #{tpu_custom_call.1} parent=1 // loop_pre_header
      _
    $region3: #{tpu_custom_call.1} parent=1 // loop_header
      %s14 = sphi 0, %s18
      %p15 = scmp.ge.s32.totalorder %s14, 4
      %s24 = sphi 0, %s26
      %s27 = sphi 0, %s24
      %s28 = sphi 0, %s27
      %s44 = sphi 0, %s28
      %s48 = sphi 0, %s48
      %s50 = sphi 0, %s48
      %s51 = sphi 0, %s50
      %s65 = sphi 0, %s51
      %s69 = sphi 0, %s69
      %s71 = sphi 0, %s69
      %s72 = sphi 0, %s71
      %s86 = sphi 0, %s72
      %s90 = sphi 0, %s90
      %s92 = sphi 0, %s90
      %s93 = sphi 0, %s92
      %s107 = sphi 0, %s93
      %s111 = sphi 0, %s111
      %s113 = sphi 0, %s111
      %s114 = sphi 0, %s113
      %s128 = sphi 0, %s114
      %s132 = sphi 0, %s132
      %s134 = sphi 0, %s132
      %s135 = sphi 0, %s134
      %s149 = sphi 0, %s135
      %s153 = sphi 0, %s153
      %s155 = sphi 0, %s153
      %s156 = sphi 0, %s155
      %s170 = sphi 0, %s156
      %s176 = sphi 0, %s178
      %s179 = sphi 0, %s176
      %s180 = sphi 0, %s179
      %s196 = sphi 0, %s180
    $region4: #{tpu_custom_call.1} parent=1 // loop_header_branch
      %17 = sbr.rel (%p15) target = $region8
    $region5: #{tpu_custom_call.1} parent=1 // loop_body
      %s19 = ssub.s32 %s14, 1
      %s20 = ssub.s32 %s14, 2
      %s21 = sadd.s32 %s14, 1
      %s22 = ssub.s32 %s14, %s21
      %p23 = scmp.eq.s32.totalorder %s22, 0
      %s25 = sadd.s32 %s24, 1
      %s26 = scalar_select %p23, %s24, %s25
      %p29 = pneg %p23
      %p30 = scmp.eq.s32.totalorder %s14, 1
      %p31 = por %p29, %p30
      %p32 = scmp.ne.s32.totalorder %s24, %s27
      %p33 = scmp.eq.s32.totalorder %s14, 0
      %p34 = por %p32, %p33
      %p35 = scmp.ne.s32.totalorder %s24, %s27
      %p36 = scmp.eq.s32.totalorder %s19, 1
      %p37 = por %p35, %p36
      %p38 = scmp.ne.s32.totalorder %s27, %s28
      %p39 = scmp.eq.s32.totalorder %s19, 0
      %p40 = por %p38, %p39
      %p41 = scmp.ne.s32.totalorder %s27, %s28
      %p42 = scmp.eq.s32.totalorder %s20, 1
      %p43 = por %p41, %p42
      %p45 = scmp.ne.s32.totalorder %s28, %s44
      %p46 = scmp.eq.s32.totalorder %s20, 0
      %p47 = por %p45, %p46
      %s49 = sadd.s32 %s48, 1
      %p52 = scmp.eq.s32.totalorder %s14, 1
      %p53 = scmp.ne.s32.totalorder %s48, %s50
      %p54 = scmp.eq.s32.totalorder %s14, 0
      %p55 = por %p53, %p54
      %p56 = scmp.ne.s32.totalorder %s48, %s50
      %p57 = scmp.eq.s32.totalorder %s19, 1
      %p58 = por %p56, %p57
      %p59 = scmp.ne.s32.totalorder %s50, %s51
      %p60 = scmp.eq.s32.totalorder %s19, 0
      %p61 = por %p59, %p60
      %p62 = scmp.ne.s32.totalorder %s50, %s51
      %p63 = scmp.eq.s32.totalorder %s20, 1
      %p64 = por %p62, %p63
      %p66 = scmp.ne.s32.totalorder %s51, %s65
      %p67 = scmp.eq.s32.totalorder %s20, 0
      %p68 = por %p66, %p67
      %s70 = sadd.s32 %s69, 1
      %p73 = scmp.eq.s32.totalorder %s14, 1
      %p74 = scmp.ne.s32.totalorder %s69, %s71
      %p75 = scmp.eq.s32.totalorder %s14, 0
      %p76 = por %p74, %p75
      %p77 = scmp.ne.s32.totalorder %s69, %s71
      %p78 = scmp.eq.s32.totalorder %s19, 1
      %p79 = por %p77, %p78
      %p80 = scmp.ne.s32.totalorder %s71, %s72
      %p81 = scmp.eq.s32.totalorder %s19, 0
      %p82 = por %p80, %p81
      %p83 = scmp.ne.s32.totalorder %s71, %s72
      %p84 = scmp.eq.s32.totalorder %s20, 1
      %p85 = por %p83, %p84
      %p87 = scmp.ne.s32.totalorder %s72, %s86
      %p88 = scmp.eq.s32.totalorder %s20, 0
      %p89 = por %p87, %p88
      %s91 = sadd.s32 %s90, 1
      %p94 = scmp.eq.s32.totalorder %s14, 1
      %p95 = scmp.ne.s32.totalorder %s90, %s92
      %p96 = scmp.eq.s32.totalorder %s14, 0
      %p97 = por %p95, %p96
      %p98 = scmp.ne.s32.totalorder %s90, %s92
      %p99 = scmp.eq.s32.totalorder %s19, 1
      %p100 = por %p98, %p99
      %p101 = scmp.ne.s32.totalorder %s92, %s93
      %p102 = scmp.eq.s32.totalorder %s19, 0
      %p103 = por %p101, %p102
      %p104 = scmp.ne.s32.totalorder %s92, %s93
      %p105 = scmp.eq.s32.totalorder %s20, 1
      %p106 = por %p104, %p105
      %p108 = scmp.ne.s32.totalorder %s93, %s107
      %p109 = scmp.eq.s32.totalorder %s20, 0
      %p110 = por %p108, %p109
      %s112 = sadd.s32 %s111, 1
      %p115 = scmp.eq.s32.totalorder %s14, 1
      %p116 = scmp.ne.s32.totalorder %s111, %s113
      %p117 = scmp.eq.s32.totalorder %s14, 0
      %p118 = por %p116, %p117
      %p119 = scmp.ne.s32.totalorder %s111, %s113
      %p120 = scmp.eq.s32.totalorder %s19, 1
      %p121 = por %p119, %p120
      %p122 = scmp.ne.s32.totalorder %s113, %s114
      %p123 = scmp.eq.s32.totalorder %s19, 0
      %p124 = por %p122, %p123
      %p125 = scmp.ne.s32.totalorder %s113, %s114
      %p126 = scmp.eq.s32.totalorder %s20, 1
      %p127 = por %p125, %p126
      %p129 = scmp.ne.s32.totalorder %s114, %s128
      %p130 = scmp.eq.s32.totalorder %s20, 0
      %p131 = por %p129, %p130
      %s133 = sadd.s32 %s132, 1
      %p136 = scmp.eq.s32.totalorder %s14, 1
      %p137 = scmp.ne.s32.totalorder %s132, %s134
      %p138 = scmp.eq.s32.totalorder %s14, 0
      %p139 = por %p137, %p138
      %p140 = scmp.ne.s32.totalorder %s132, %s134
      %p141 = scmp.eq.s32.totalorder %s19, 1
      %p142 = por %p140, %p141
      %p143 = scmp.ne.s32.totalorder %s134, %s135
      %p144 = scmp.eq.s32.totalorder %s19, 0
      %p145 = por %p143, %p144
      %p146 = scmp.ne.s32.totalorder %s134, %s135
      %p147 = scmp.eq.s32.totalorder %s20, 1
      %p148 = por %p146, %p147
      %p150 = scmp.ne.s32.totalorder %s135, %s149
      %p151 = scmp.eq.s32.totalorder %s20, 0
      %p152 = por %p150, %p151
      %s154 = sadd.s32 %s153, 1
      %p157 = scmp.eq.s32.totalorder %s14, 1
      %p158 = scmp.ne.s32.totalorder %s153, %s155
      %p159 = scmp.eq.s32.totalorder %s14, 0
      %p160 = por %p158, %p159
      %p161 = scmp.ne.s32.totalorder %s153, %s155
      %p162 = scmp.eq.s32.totalorder %s19, 1
      %p163 = por %p161, %p162
      %p164 = scmp.ne.s32.totalorder %s155, %s156
      %p165 = scmp.eq.s32.totalorder %s19, 0
      %p166 = por %p164, %p165
      %p167 = scmp.ne.s32.totalorder %s155, %s156
      %p168 = scmp.eq.s32.totalorder %s20, 1
      %p169 = por %p167, %p168
      %p171 = scmp.ne.s32.totalorder %s156, %s170
      %p172 = scmp.eq.s32.totalorder %s20, 0
      %p173 = por %p171, %p172
      %s174 = ssub.s32 %s14, %s21
      %p175 = scmp.eq.s32.totalorder %s174, 0
      %s177 = sadd.s32 %s176, 1
      %s178 = scalar_select %p175, %s176, %s177
      %p181 = pneg %p175
      %p182 = scmp.eq.s32.totalorder %s14, 1
      %p183 = por %p181, %p182
      %p184 = scmp.ne.s32.totalorder %s176, %s179
      %p185 = scmp.eq.s32.totalorder %s14, 0
      %p186 = por %p184, %p185
      %p187 = scmp.ne.s32.totalorder %s176, %s179
      %p188 = scmp.eq.s32.totalorder %s19, 1
      %p189 = por %p187, %p188
      %p190 = scmp.ne.s32.totalorder %s179, %s180
      %p191 = scmp.eq.s32.totalorder %s19, 0
      %p192 = por %p190, %p191
      %p193 = scmp.ne.s32.totalorder %s179, %s180
      %p194 = scmp.eq.s32.totalorder %s20, 1
      %p195 = por %p193, %p194
      %p197 = scmp.ne.s32.totalorder %s180, %s196
      %p198 = scmp.eq.s32.totalorder %s20, 0
      %p199 = por %p197, %p198
      %p200 = scmp.le.s32.totalorder 1, %s14
      %p201 = scmp.lt.s32.totalorder %s14, 3
      %p202 = pnand %p200, %p201
      %p203 = pneg %p202
      // Predicated region
      $region9: #{tpu_custom_call.1} parent=5 // pred_check
        _
      $region10: #{tpu_custom_call.1} parent=5 // pred_check_branch
        %205 = sbr.rel (%p202) target = $region12
      $region11: #{tpu_custom_call.1} parent=5 // pred_region
        %s206 = ssub.s32 %s14, 1
        // Predicated region
        $region13: #{tpu_custom_call.1} parent=11 // pred_check
          %p207 = pneg %p61
        $region14: #{tpu_custom_call.1} parent=11 // pred_check_branch
          %209 = sbr.rel (%p207) target = $region16
        $region15: #{tpu_custom_call.1} parent=11 // pred_region
          _
        $region16: #{tpu_custom_call.1} parent=11 // pred_fallthru
          _
        // Predicated region
        $region17: #{tpu_custom_call.1} parent=11 // pred_check
          %p210 = pneg %p82
        $region18: #{tpu_custom_call.1} parent=11 // pred_check_branch
          %212 = sbr.rel (%p210) target = $region20
        $region19: #{tpu_custom_call.1} parent=11 // pred_region
          _
        $region20: #{tpu_custom_call.1} parent=11 // pred_fallthru
          _
        // Predicated region
        $region21: #{tpu_custom_call.1} parent=11 // pred_check
          %p213 = pneg %p103
        $region22: #{tpu_custom_call.1} parent=11 // pred_check_branch
          %215 = sbr.rel (%p213) target = $region24
        $region23: #{tpu_custom_call.1} parent=11 // pred_region
          %s217 = ssub.s32 9216, 9216
          %218 = vsyncadd [#allocation5], %s217
          %s219 = sshll.u32 [#allocation4], 4
          %s220 = int_to_ptr.vmem [resolvable:$true] %s219
          %225 = dma.hbm_to_vmem [thread:$0]  %s3, 9216, %s220, [#allocation5], 64, 64, 4
        $region24: #{tpu_custom_call.1} parent=11 // pred_fallthru
          _
        // Predicated region
        $region25: #{tpu_custom_call.1} parent=11 // pred_check
          %p226 = pneg %p124
        $region26: #{tpu_custom_call.1} parent=11 // pred_check_branch
          %228 = sbr.rel (%p226) target = $region28
        $region27: #{tpu_custom_call.1} parent=11 // pred_region
          _
        $region28: #{tpu_custom_call.1} parent=11 // pred_fallthru
          _
        // Predicated region
        $region29: #{tpu_custom_call.1} parent=11 // pred_check
          %p229 = pneg %p145
        $region30: #{tpu_custom_call.1} parent=11 // pred_check_branch
          %231 = sbr.rel (%p229) target = $region32
        $region31: #{tpu_custom_call.1} parent=11 // pred_region
          _
        $region32: #{tpu_custom_call.1} parent=11 // pred_fallthru
          _
        // Predicated region
        $region33: #{tpu_custom_call.1} parent=11 // pred_check
          %p232 = pneg %p166
        $region34: #{tpu_custom_call.1} parent=11 // pred_check_branch
          %234 = sbr.rel (%p232) target = $region36
        $region35: #{tpu_custom_call.1} parent=11 // pred_region
          _
        $region36: #{tpu_custom_call.1} parent=11 // pred_fallthru
          _
      $region12: #{tpu_custom_call.1} parent=5 // pred_fallthru
        _
      %p235 = scmp.lt.s32.totalorder %s14, 2
      // Predicated region
      $region37: #{tpu_custom_call.1} parent=5 // pred_check
        %p236 = pneg %p235
      $region38: #{tpu_custom_call.1} parent=5 // pred_check_branch
        %238 = sbr.rel (%p236) target = $region40
      $region39: #{tpu_custom_call.1} parent=5 // pred_region
        // Predicated region
        $region41: #{tpu_custom_call.1} parent=39 // pred_check
          %p239 = pneg %p34
        $region42: #{tpu_custom_call.1} parent=39 // pred_check_branch
          %241 = sbr.rel (%p239) target = $region44
        $region43: #{tpu_custom_call.1} parent=39 // pred_region
          %p242 = scmp.lt.s32.totalorder %s14, 1
          %s243 = scalar_select %p242, %s14, 1
          %s244 = smul.addr %s243, 8
          %s245 = smul.addr %s244, 4
          %s246 = scalar_lea.vmem %s0, %s245
        $region44: #{tpu_custom_call.1} parent=39 // pred_fallthru
          _
      $region40: #{tpu_custom_call.1} parent=5 // pred_fallthru
        _
      %p247 = scmp.le.s32.totalorder 1, %s14
      %p248 = scmp.lt.s32.totalorder %s14, 3
      %p249 = pnand %p247, %p248
      %p250 = pneg %p249
      // Predicated region
      $region45: #{tpu_custom_call.1} parent=5 // pred_check
        _
      $region46: #{tpu_custom_call.1} parent=5 // pred_check_branch
        %252 = sbr.rel (%p249) target = $region48
      $region47: #{tpu_custom_call.1} parent=5 // pred_region
        %s253 = ssub.s32 %s14, 1
        // Predicated region
        $region49: #{tpu_custom_call.1} parent=47 // pred_check
          %p254 = pneg %p103
        $region50: #{tpu_custom_call.1} parent=47 // pred_check_branch
          %256 = sbr.rel (%p254) target = $region52
        $region51: #{tpu_custom_call.1} parent=47 // pred_region
          %257 = dma.done [#allocation5], 9216
        $region52: #{tpu_custom_call.1} parent=47 // pred_fallthru
          _
        %p258 = scmp.lt.s32.totalorder %s19, 1
        %s259 = scalar_select %p258, %s19, 1
        %s260 = smul.addr %s259, 8
        %s261 = smul.addr %s260, 4
        %s262 = scalar_lea.vmem %s0, %s261
        %p263 = pneg %p40
        %p264 = pneg %p37
        %p265 = pneg %p61
        %p266 = pneg %p58
        %p267 = pneg %p82
        %p268 = pneg %p79
        %p269 = pneg %p103
        %p270 = pneg %p100
        %p271 = pneg %p124
        %p272 = pneg %p121
        %p273 = pneg %p145
        %p274 = pneg %p142
        %p275 = pneg %p166
        %p276 = pneg %p163
        %p277 = pneg %p192
        %p278 = pneg %p189
        %p279 = scmp.lt.s32.totalorder %s19, 1
        %s280 = scalar_select %p279, %s19, 1
        %s281 = smul.addr %s280, 8
        %s282 = smul.addr %s281, 4
        %s283 = scalar_lea.vmem %s7, %s282
        %p284 = scmp.lt.s32.totalorder %s19, 1
        %s285 = scalar_select %p284, %s19, 1
        %s286 = smul.addr %s285, 8
        %s287 = smul.addr %s286, 4
        %s288 = scalar_lea.vmem %s0, %s287
        %p289 = scmp.lt.s32.totalorder %s19, 1
        %s290 = scalar_select %p289, %s19, 1
        %s291 = smul.addr %s290, 8
        %s292 = smul.addr %s291, 4
        %s293 = scalar_lea.vmem %s7, %s292
        %297 = vst [vmem:[#allocation2] sm:$0xf] 0
        %298 = vst [vmem:[#allocation2 + $0x4] sm:$0xf] 0
        %299 = vst [vmem:[#allocation2 + $0x28] sm:$0xf] 0
        %300 = vst [vmem:[#allocation2 + $0x2c] sm:$0xf] 0
        %v301 = vld [vmem:[%s288] sm:$0xf]
        %v302 = vld [vmem:[%s288 + $0x4] sm:$0xf]
        %v303 = vld [vmem:[%s288 + $0x8] sm:$0xf]
        %v304 = vld [vmem:[%s288 + $0xc] sm:$0xf]
        %v305 = vld [vmem:[%s288 + $0x10] sm:$0xf]
        %v306 = vld [vmem:[%s288 + $0x14] sm:$0xf]
        %v307 = vld [vmem:[%s288 + $0x18] sm:$0xf]
        %v308 = vld [vmem:[%s288 + $0x1c] sm:$0xf]
        %v309 = vld [vmem:[%s1] sm:$0xf]
        %v310 = vld [vmem:[%s1 + $0x4] sm:$0xf]
        %v311 = vld [vmem:[%s2] sm:$0x1]
        %v313 = vlaneseq
        %v314 = vshrl.u32 %v313, 7
        %v315 = vsub.s32 0, %v314
        %v316 = vrot.slane %v311, %v315
        %v326 = vunpack.c.l.b16 %v301
        %v327 = vunpack.c.l.b16 %v302
        %v328 = vunpack.c.l.b16 %v303
        %v329 = vunpack.c.l.b16 %v304
        %v330 = vunpack.c.l.b16 %v305
        %v331 = vunpack.c.l.b16 %v306
        %v332 = vunpack.c.l.b16 %v307
        %v333 = vunpack.c.l.b16 %v308
        %v334 = vpack.c.b16 %v327, %v326
        %v335 = vpack.c.b16 %v329, %v328
        %v336 = vpack.c.b16 %v331, %v330
        %v337 = vpack.c.b16 %v333, %v332
        %v340 = vunpack.c.l.b16 %v309
        %v341 = vunpack.c.l.b16 %v310
        %v342 = vpack.c.b16 %v341, %v340
        %vm344 = vcmask 130048
        %v346 = vsel %vm344, %v334, 0
        %v349 = vsel %vm344, %v335, 0
        %v352 = vsel %vm344, %v336, 0
        %v355 = vsel %vm344, %v337, 0
        %357 = vmatprep.subr.bf16.mxu0 0
        %358 = vmatpush1.bf16.msra.mxu0 0
        %359 = vmatprep.subr.bf16.mxu0 0
        %360 = vmatpush1.bf16.msra.mxu0 0
        %361 = vmatprep.subr.bf16.mxu0 0
        %362 = vmatpush1.bf16.msra.mxu0 0
        %363 = vmatprep.subr.bf16.mxu0 0
        %364 = vmatpush1.bf16.msra.mxu0 0
        %365 = vmatprep.subr.bf16.mxu0 0
        %366 = vmatpush1.bf16.msra.mxu0 0
        %367 = vmatprep.subr.bf16.mxu0 0
        %368 = vmatpush1.bf16.msra.mxu0 0
        %369 = vmatprep.subr.bf16.mxu0 0
        %370 = vmatpush1.bf16.msra.mxu0 0
        %371 = vmatprep.subr.bf16.mxu0 0
        %372 = vmatpush1.bf16.msra.mxu0 %v342
        %373 = vmatprep.subr.bf16.mxu0 0
        %374 = vmatpush2.bf16.msra.mxu0 0
        %375 = vmatprep.subr.bf16.mxu0 0
        %376 = vmatpush2.bf16.msra.mxu0 0
        %377 = vmatprep.subr.bf16.mxu0 0
        %378 = vmatpush2.bf16.msra.mxu0 0
        %379 = vmatprep.subr.bf16.mxu0 0
        %380 = vmatpush2.bf16.msra.mxu0 0
        %381 = vmatprep.subr.bf16.mxu0 0
        %382 = vmatpush2.bf16.msra.mxu0 0
        %383 = vmatprep.subr.bf16.mxu0 0
        %384 = vmatpush2.bf16.msra.mxu0 0
        %385 = vmatprep.subr.bf16.mxu0 0
        %386 = vmatpush2.bf16.msra.mxu0 0
        %387 = vmatprep.subr.bf16.mxu0 0
        %388 = vmatpush2.bf16.msra.mxu0 0
        %389 = vmatprep.mubr.bf16.mxu0 0
        %390 = vmatmul.mubr.bf16.gmra.mxu0 %v346
        %v391 = vpop.f32.mrf.mxu0
        %v392 = vadd.f32 %v316, %v391
        %v393 = vpop.f32.mrf.mxu0
        %v394 = vpop.f32.mrf.mxu0
        %v395 = vadd.f32 %v316, %v394
        %v396 = vpop.f32.mrf.mxu0
        %397 = vmatprep.mubr.bf16.mxu0 0
        %398 = vmatmul.mubr.bf16.gmra.mxu0 %v349
        %v399 = vpop.f32.mrf.mxu0
        %v400 = vadd.f32 %v316, %v399
        %v401 = vpop.f32.mrf.mxu0
        %v402 = vpop.f32.mrf.mxu0
        %v403 = vadd.f32 %v316, %v402
        %v404 = vpop.f32.mrf.mxu0
        %405 = vmatprep.mubr.bf16.mxu0 0
        %406 = vmatmul.mubr.bf16.gmra.mxu0 %v352
        %v407 = vpop.f32.mrf.mxu0
        %v408 = vadd.f32 %v316, %v407
        %v409 = vpop.f32.mrf.mxu0
        %v410 = vpop.f32.mrf.mxu0
        %v411 = vadd.f32 %v316, %v410
        %v412 = vpop.f32.mrf.mxu0
        %413 = vmatprep.mubr.bf16.mxu0 0
        %414 = vmatmul.mubr.bf16.gmra.mxu0 %v355
        %v415 = vpop.f32.mrf.mxu0
        %v416 = vadd.f32 %v316, %v415
        %v417 = vpop.f32.mrf.mxu0
        %v418 = vpop.f32.mrf.mxu0
        %v419 = vadd.f32 %v316, %v418
        %v420 = vpop.f32.mrf.mxu0
        %421 = vdwg.mxu0
        %v422 = vmax.f32 %v392, 0.0
        %v423 = vmax.f32 %v395, 0.0
        %v424 = vmax.f32 %v400, 0.0
        %v425 = vmax.f32 %v403, 0.0
        %v426 = vmax.f32 %v408, 0.0
        %v427 = vmax.f32 %v411, 0.0
        %v428 = vmax.f32 %v416, 0.0
        %v429 = vmax.f32 %v419, 0.0
        %v430 = vpack.c.bf16 %v423, %v422
        %v431 = vpack.c.bf16 %v425, %v424
        %v432 = vpack.c.bf16 %v427, %v426
        %v433 = vpack.c.bf16 %v429, %v428
        %v434 = vlaneseq
        %v435 = vshrl.u32 %v434, 7
        %v436 = vadd.s32 %v435, 8
        %v437 = vadd.s32 %v435, 16
        %v438 = vadd.s32 %v435, 24
        %v439 = vadd.s32 %v435, 32
        %v440 = vadd.s32 %v435, 40
        %v441 = vadd.s32 %v435, 48
        %v442 = vadd.s32 %v435, 56
        %vm443 = vcmp.lt.s32.totalorder %v435, 0
        %v444 = vsub.s32 0, %v435
        %v445 = vsel %vm443, %v444, %v435
        %v446 = vshrl.u32 %v445, 3
        %v447 = vand.u32 %v445, 7
        %v448 = vsub.s32 0, %v447
        %v449 = vsel %vm443, %v448, %v447
        %vm450 = vcmp.lt.s32.totalorder %v436, 0
        %v451 = vsub.s32 0, %v436
        %v452 = vsel %vm450, %v451, %v436
        %v453 = vshrl.u32 %v452, 3
        %v454 = vand.u32 %v452, 7
        %v455 = vsub.s32 0, %v454
        %v456 = vsel %vm450, %v455, %v454
        %vm457 = vcmp.lt.s32.totalorder %v437, 0
        %v458 = vsub.s32 0, %v437
        %v459 = vsel %vm457, %v458, %v437
        %v460 = vshrl.u32 %v459, 3
        %v461 = vand.u32 %v459, 7
        %v462 = vsub.s32 0, %v461
        %v463 = vsel %vm457, %v462, %v461
        %vm464 = vcmp.lt.s32.totalorder %v438, 0
        %v465 = vsub.s32 0, %v438
        %v466 = vsel %vm464, %v465, %v438
        %v467 = vshrl.u32 %v466, 3
        %v468 = vand.u32 %v466, 7
        %v469 = vsub.s32 0, %v468
        %v470 = vsel %vm464, %v469, %v468
        %vm471 = vcmp.lt.s32.totalorder %v439, 0
        %v472 = vsub.s32 0, %v439
        %v473 = vsel %vm471, %v472, %v439
        %v474 = vshrl.u32 %v473, 3
        %v475 = vand.u32 %v473, 7
        %v476 = vsub.s32 0, %v475
        %v477 = vsel %vm471, %v476, %v475
        %vm478 = vcmp.lt.s32.totalorder %v440, 0
        %v479 = vsub.s32 0, %v440
        %v480 = vsel %vm478, %v479, %v440
        %v481 = vshrl.u32 %v480, 3
        %v482 = vand.u32 %v480, 7
        %v483 = vsub.s32 0, %v482
        %v484 = vsel %vm478, %v483, %v482
        %vm485 = vcmp.lt.s32.totalorder %v441, 0
        %v486 = vsub.s32 0, %v441
        %v487 = vsel %vm485, %v486, %v441
        %v488 = vshrl.u32 %v487, 3
        %v489 = vand.u32 %v487, 7
        %v490 = vsub.s32 0, %v489
        %v491 = vsel %vm485, %v490, %v489
        %vm492 = vcmp.lt.s32.totalorder %v442, 0
        %v493 = vsub.s32 0, %v442
        %v494 = vsel %vm492, %v493, %v442
        %v495 = vshrl.u32 %v494, 3
        %v496 = vand.u32 %v494, 7
        %v497 = vsub.s32 0, %v496
        %v498 = vsel %vm492, %v497, %v496
        %vm499 = vcmp.ne.s32.totalorder %v449, 0
        %vm500 = vcmp.ne.s32.totalorder %v456, 0
        %vm501 = vcmp.ne.s32.totalorder %v463, 0
        %vm502 = vcmp.ne.s32.totalorder %v470, 0
        %vm503 = vcmp.ne.s32.totalorder %v477, 0
        %vm504 = vcmp.ne.s32.totalorder %v484, 0
        %vm505 = vcmp.ne.s32.totalorder %v491, 0
        %vm506 = vcmp.ne.s32.totalorder %v498, 0
        %vm507 = vcmp.lt.s32.totalorder %v449, 0
        %vm508 = vcmp.lt.s32.totalorder %v456, 0
        %vm509 = vcmp.lt.s32.totalorder %v463, 0
        %vm510 = vcmp.lt.s32.totalorder %v470, 0
        %vm511 = vcmp.lt.s32.totalorder %v477, 0
        %vm512 = vcmp.lt.s32.totalorder %v484, 0
        %vm513 = vcmp.lt.s32.totalorder %v491, 0
        %vm514 = vcmp.lt.s32.totalorder %v498, 0
        %vm515 = vmand %vm507, %vm499
        %vm516 = vmand %vm508, %vm500
        %vm517 = vmand %vm509, %vm501
        %vm518 = vmand %vm510, %vm502
        %vm519 = vmand %vm511, %vm503
        %vm520 = vmand %vm512, %vm504
        %vm521 = vmand %vm513, %vm505
        %vm522 = vmand %vm514, %vm506
        %v523 = vadd.s32 %v449, 8
        %v524 = vadd.s32 %v456, 8
        %v525 = vadd.s32 %v463, 8
        %v526 = vadd.s32 %v470, 8
        %v527 = vadd.s32 %v477, 8
        %v528 = vadd.s32 %v484, 8
        %v529 = vadd.s32 %v491, 8
        %v530 = vadd.s32 %v498, 8
        %v531 = vsel %vm515, %v523, %v449
        %v532 = vsel %vm516, %v524, %v456
        %v533 = vsel %vm517, %v525, %v463
        %v534 = vsel %vm518, %v526, %v470
        %v535 = vsel %vm519, %v527, %v477
        %v536 = vsel %vm520, %v528, %v484
        %v537 = vsel %vm521, %v529, %v491
        %v538 = vsel %vm522, %v530, %v498
        %vm539 = vcmp.ge.s32.totalorder %v531, 1
        %vm540 = vcmp.ge.s32.totalorder %v532, 1
        %vm541 = vcmp.ge.s32.totalorder %v533, 1
        %vm542 = vcmp.ge.s32.totalorder %v534, 1
        %vm543 = vcmp.ge.s32.totalorder %v535, 1
        %vm544 = vcmp.ge.s32.totalorder %v536, 1
        %vm545 = vcmp.ge.s32.totalorder %v537, 1
        %vm546 = vcmp.ge.s32.totalorder %v538, 1
        %vm547 = vcmp.lt.s32.totalorder %v531, 7
        %vm548 = vcmp.lt.s32.totalorder %v532, 7
        %vm549 = vcmp.lt.s32.totalorder %v533, 7
        %vm550 = vcmp.lt.s32.totalorder %v534, 7
        %vm551 = vcmp.lt.s32.totalorder %v535, 7
        %vm552 = vcmp.lt.s32.totalorder %v536, 7
        %vm553 = vcmp.lt.s32.totalorder %v537, 7
        %vm554 = vcmp.lt.s32.totalorder %v538, 7
        %v559 = vunpack.c.l.b16 %v430
        %v560 = vunpack.c.h.b16 %v430
        %v561 = vunpack.c.l.b16 %v431
        %v562 = vunpack.c.h.b16 %v431
        %v563 = vunpack.c.l.b16 %v432
        %v564 = vunpack.c.h.b16 %v432
        %v565 = vunpack.c.l.b16 %v433
        %v566 = vunpack.c.h.b16 %v433
        %v567 = vpack.c.b16 %v559, %v559
        %v568 = vpack.c.b16 %v560, %v560
        %v569 = vpack.c.b16 %v561, %v561
        %v570 = vpack.c.b16 %v562, %v562
        %v571 = vpack.c.b16 %v563, %v563
        %v572 = vpack.c.b16 %v564, %v564
        %v573 = vpack.c.b16 %v565, %v565
        %v574 = vpack.c.b16 %v566, %v566
        %583 = vst [vmem:[#allocation2 + $0x8] sm:$0xf] %v567
        %584 = vst [vmem:[#allocation2 + $0xc] sm:$0xf] %v568
        %585 = vst [vmem:[#allocation2 + $0x10] sm:$0xf] %v569
        %586 = vst [vmem:[#allocation2 + $0x14] sm:$0xf] %v570
        %587 = vst [vmem:[#allocation2 + $0x18] sm:$0xf] %v571
        %588 = vst [vmem:[#allocation2 + $0x1c] sm:$0xf] %v572
        %589 = vst [vmem:[#allocation2 + $0x20] sm:$0xf] %v573
        %590 = vst [vmem:[#allocation2 + $0x24] sm:$0xf] %v574
        %v591 = vld [vmem:[#allocation2] sm:$0x8]
        %v592 = vld [vmem:[#allocation2 + $0x4] sm:$0xf]
        %v593 = vld [vmem:[#allocation2 + $0x8] sm:$0xf]
        %v594 = vld [vmem:[#allocation2 + $0xc] sm:$0xf]
        %v595 = vld [vmem:[#allocation2 + $0x10] sm:$0xf]
        %v596 = vld [vmem:[#allocation2 + $0x14] sm:$0xf]
        %v597 = vld [vmem:[#allocation2 + $0x18] sm:$0xf]
        %v598 = vld [vmem:[#allocation2 + $0x1c] sm:$0xf]
        %v599 = vld [vmem:[#allocation2 + $0x20] sm:$0xf]
        %v600 = vsel %vm539, 1, 0
        %v601 = vsel %vm540, 1, 0
        %v602 = vsel %vm541, 1, 0
        %v603 = vsel %vm542, 1, 0
        %v604 = vsel %vm543, 1, 0
        %v605 = vsel %vm544, 1, 0
        %v606 = vsel %vm545, 1, 0
        %v607 = vsel %vm546, 1, 0
        %vm608 = vcmp.eq.s32.totalorder %v600, 1
        %vm609 = vcmp.eq.s32.totalorder %v601, 1
        %vm610 = vcmp.eq.s32.totalorder %v602, 1
        %vm611 = vcmp.eq.s32.totalorder %v603, 1
        %vm612 = vcmp.eq.s32.totalorder %v604, 1
        %vm613 = vcmp.eq.s32.totalorder %v605, 1
        %vm614 = vcmp.eq.s32.totalorder %v606, 1
        %vm615 = vcmp.eq.s32.totalorder %v607, 1
        %vm616 = vmpackc.low %vm608, %vm608
        %vm617 = vmpackc.low %vm609, %vm609
        %vm618 = vmpackc.low %vm610, %vm610
        %vm619 = vmpackc.low %vm611, %vm611
        %vm620 = vmpackc.low %vm612, %vm612
        %vm621 = vmpackc.low %vm613, %vm613
        %vm622 = vmpackc.low %vm614, %vm614
        %vm623 = vmpackc.low %vm615, %vm615
        %v624 = vsel %vm616, 65537, 0
        %v625 = vsel %vm617, 65537, 0
        %v626 = vsel %vm618, 65537, 0
        %v627 = vsel %vm619, 65537, 0
        %v628 = vsel %vm620, 65537, 0
        %v629 = vsel %vm621, 65537, 0
        %v630 = vsel %vm622, 65537, 0
        %v631 = vsel %vm623, 65537, 0
        %vm632 = vsmask.f32 3328
        %vm633 = vsmask.f32 7440
        %vm634 = vmor %vm632, %vm633
        %v636 = vshll.u32 %v624, 16
        %v638 = vrot.slane %v636, 5
        %v639 = vshrl.u32 %v624, 16
        %v641 = vrot.slane %v639, 4
        %v642 = vor.u32 %v641, %v638
        %v643 = vrot.slane %v642, 4
        %v645 = vshll.u32 %v625, 16
        %v647 = vrot.slane %v645, 5
        %v648 = vsel %vm634, %v643, %v647
        %v649 = vshrl.u32 %v625, 16
        %v651 = vrot.slane %v649, 4
        %v652 = vor.u32 %v651, %v647
        %v653 = vrot.slane %v652, 4
        %v655 = vshll.u32 %v626, 16
        %v657 = vrot.slane %v655, 5
        %v658 = vsel %vm634, %v653, %v657
        %v659 = vshrl.u32 %v626, 16
        %v661 = vrot.slane %v659, 4
        %v662 = vor.u32 %v661, %v657
        %v663 = vrot.slane %v662, 4
        %v665 = vshll.u32 %v627, 16
        %v667 = vrot.slane %v665, 5
        %v668 = vsel %vm634, %v663, %v667
        %v669 = vshrl.u32 %v627, 16
        %v671 = vrot.slane %v669, 4
        %v672 = vor.u32 %v671, %v667
        %v673 = vrot.slane %v672, 4
        %v675 = vshll.u32 %v628, 16
        %v677 = vrot.slane %v675, 5
        %v678 = vsel %vm634, %v673, %v677
        %v679 = vshrl.u32 %v628, 16
        %v681 = vrot.slane %v679, 4
        %v682 = vor.u32 %v681, %v677
        %v683 = vrot.slane %v682, 4
        %v685 = vshll.u32 %v629, 16
        %v687 = vrot.slane %v685, 5
        %v688 = vsel %vm634, %v683, %v687
        %v689 = vshrl.u32 %v629, 16
        %v691 = vrot.slane %v689, 4
        %v692 = vor.u32 %v691, %v687
        %v693 = vrot.slane %v692, 4
        %v695 = vshll.u32 %v630, 16
        %v697 = vrot.slane %v695, 5
        %v698 = vsel %vm634, %v693, %v697
        %v699 = vshrl.u32 %v630, 16
        %v701 = vrot.slane %v699, 4
        %v702 = vor.u32 %v701, %v697
        %v703 = vrot.slane %v702, 4
        %v705 = vshll.u32 %v631, 16
        %v707 = vrot.slane %v705, 5
        %v708 = vsel %vm634, %v703, %v707
        %v709 = vshrl.u32 %v631, 16
        %v711 = vrot.slane %v709, 4
        %v712 = vor.u32 %v711, %v707
        %v713 = vrot.slane %v712, 4
        %vm714 = vcmp.ne.s16.totalorder %v638, 0
        %vm715 = vcmp.ne.s16.totalorder %v648, 0
        %vm716 = vcmp.ne.s16.totalorder %v658, 0
        %vm717 = vcmp.ne.s16.totalorder %v668, 0
        %vm718 = vcmp.ne.s16.totalorder %v678, 0
        %vm719 = vcmp.ne.s16.totalorder %v688, 0
        %vm720 = vcmp.ne.s16.totalorder %v698, 0
        %vm721 = vcmp.ne.s16.totalorder %v708, 0
        %vm722 = vcmp.ne.s16.totalorder %v713, 0
        %v723 = vsel %vm714, %v591, 0
        %v724 = vsel %vm715, %v592, 0
        %v725 = vsel %vm716, %v593, 0
        %v726 = vsel %vm717, %v594, 0
        %v727 = vsel %vm718, %v595, 0
        %v728 = vsel %vm719, %v596, 0
        %v729 = vsel %vm720, %v597, 0
        %v730 = vsel %vm721, %v598, 0
        %v731 = vsel %vm722, %v599, 0
        %vm732 = vsmask.f32 256
        %vm733 = vsmask.f32 4368
        %vm734 = vmor %vm732, %vm733
        %v736 = vshrl.u32 %v723, 16
        %v738 = vrot.slane %v736, 7
        %v739 = vrot.slane %v738, 4
        %v741 = vshrl.u32 %v724, 16
        %v743 = vrot.slane %v741, 7
        %v744 = vshll.u32 %v724, 16
        %v746 = vor.u32 %v743, %v744
        %v747 = vsel %vm734, %v739, %v746
        %v748 = vrot.slane %v743, 4
        %v750 = vshrl.u32 %v725, 16
        %v752 = vrot.slane %v750, 7
        %v753 = vshll.u32 %v725, 16
        %v755 = vor.u32 %v752, %v753
        %v756 = vsel %vm734, %v748, %v755
        %v757 = vrot.slane %v752, 4
        %v759 = vshrl.u32 %v726, 16
        %v761 = vrot.slane %v759, 7
        %v762 = vshll.u32 %v726, 16
        %v764 = vor.u32 %v761, %v762
        %v765 = vsel %vm734, %v757, %v764
        %v766 = vrot.slane %v761, 4
        %v768 = vshrl.u32 %v727, 16
        %v770 = vrot.slane %v768, 7
        %v771 = vshll.u32 %v727, 16
        %v773 = vor.u32 %v770, %v771
        %v774 = vsel %vm734, %v766, %v773
        %v775 = vrot.slane %v770, 4
        %v777 = vshrl.u32 %v728, 16
        %v779 = vrot.slane %v777, 7
        %v780 = vshll.u32 %v728, 16
        %v782 = vor.u32 %v779, %v780
        %v783 = vsel %vm734, %v775, %v782
        %v784 = vrot.slane %v779, 4
        %v786 = vshrl.u32 %v729, 16
        %v788 = vrot.slane %v786, 7
        %v789 = vshll.u32 %v729, 16
        %v791 = vor.u32 %v788, %v789
        %v792 = vsel %vm734, %v784, %v791
        %v793 = vrot.slane %v788, 4
        %v795 = vshrl.u32 %v730, 16
        %v797 = vrot.slane %v795, 7
        %v798 = vshll.u32 %v730, 16
        %v800 = vor.u32 %v797, %v798
        %v801 = vsel %vm734, %v793, %v800
        %v802 = vrot.slane %v797, 4
        %v804 = vshrl.u32 %v731, 16
        %v806 = vrot.slane %v804, 7
        %v807 = vshll.u32 %v731, 16
        %v809 = vor.u32 %v806, %v807
        %v810 = vsel %vm734, %v802, %v809
        %819 = vst [vmem:[#allocation3] sm:$0xf] %v747
        %820 = vst [vmem:[#allocation3 + $0x24] sm:$0xf] %v756
        %821 = vst [vmem:[#allocation3 + $0x48] sm:$0xf] %v765
        %822 = vst [vmem:[#allocation3 + $0x6c] sm:$0xf] %v774
        %823 = vst [vmem:[#allocation3 + $0x90] sm:$0xf] %v783
        %824 = vst [vmem:[#allocation3 + $0xb4] sm:$0xf] %v792
        %825 = vst [vmem:[#allocation3 + $0xd8] sm:$0xf] %v801
        %826 = vst [vmem:[#allocation3 + $0xfc] sm:$0xf] %v810
        %v827 = vld [vmem:[#allocation2 + $0x4] sm:$0xf]
        %v828 = vld [vmem:[#allocation2 + $0x8] sm:$0xf]
        %v829 = vld [vmem:[#allocation2 + $0xc] sm:$0xf]
        %v830 = vld [vmem:[#allocation2 + $0x10] sm:$0xf]
        %v831 = vld [vmem:[#allocation2 + $0x14] sm:$0xf]
        %v832 = vld [vmem:[#allocation2 + $0x18] sm:$0xf]
        %v833 = vld [vmem:[#allocation2 + $0x1c] sm:$0xf]
        %v834 = vld [vmem:[#allocation2 + $0x20] sm:$0xf]
        %835 = vst [vmem:[#allocation3 + $0x4] sm:$0xf] %v827
        %836 = vst [vmem:[#allocation3 + $0x28] sm:$0xf] %v828
        %837 = vst [vmem:[#allocation3 + $0x4c] sm:$0xf] %v829
        %838 = vst [vmem:[#allocation3 + $0x70] sm:$0xf] %v830
        %839 = vst [vmem:[#allocation3 + $0x94] sm:$0xf] %v831
        %840 = vst [vmem:[#allocation3 + $0xb8] sm:$0xf] %v832
        %841 = vst [vmem:[#allocation3 + $0xdc] sm:$0xf] %v833
        %842 = vst [vmem:[#allocation3 + $0x100] sm:$0xf] %v834
        %v843 = vld [vmem:[#allocation2 + $0x4] sm:$0xf]
        %v844 = vld [vmem:[#allocation2 + $0x8] sm:$0xf]
        %v845 = vld [vmem:[#allocation2 + $0xc] sm:$0xf]
        %v846 = vld [vmem:[#allocation2 + $0x10] sm:$0xf]
        %v847 = vld [vmem:[#allocation2 + $0x14] sm:$0xf]
        %v848 = vld [vmem:[#allocation2 + $0x18] sm:$0xf]
        %v849 = vld [vmem:[#allocation2 + $0x1c] sm:$0xf]
        %v850 = vld [vmem:[#allocation2 + $0x20] sm:$0xf]
        %v851 = vld [vmem:[#allocation2 + $0x24] sm:$0x1]
        %v852 = vsel %vm547, 1, 0
        %v853 = vsel %vm548, 1, 0
        %v854 = vsel %vm549, 1, 0
        %v855 = vsel %vm550, 1, 0
        %v856 = vsel %vm551, 1, 0
        %v857 = vsel %vm552, 1, 0
        %v858 = vsel %vm553, 1, 0
        %v859 = vsel %vm554, 1, 0
        %vm860 = vcmp.eq.s32.totalorder %v852, 1
        %vm861 = vcmp.eq.s32.totalorder %v853, 1
        %vm862 = vcmp.eq.s32.totalorder %v854, 1
        %vm863 = vcmp.eq.s32.totalorder %v855, 1
        %vm864 = vcmp.eq.s32.totalorder %v856, 1
        %vm865 = vcmp.eq.s32.totalorder %v857, 1
        %vm866 = vcmp.eq.s32.totalorder %v858, 1
        %vm867 = vcmp.eq.s32.totalorder %v859, 1
        %vm868 = vmpackc.low %vm860, %vm860
        %vm869 = vmpackc.low %vm861, %vm861
        %vm870 = vmpackc.low %vm862, %vm862
        %vm871 = vmpackc.low %vm863, %vm863
        %vm872 = vmpackc.low %vm864, %vm864
        %vm873 = vmpackc.low %vm865, %vm865
        %vm874 = vmpackc.low %vm866, %vm866
        %vm875 = vmpackc.low %vm867, %vm867
        %v876 = vsel %vm868, 65537, 0
        %v877 = vsel %vm869, 65537, 0
        %v878 = vsel %vm870, 65537, 0
        %v879 = vsel %vm871, 65537, 0
        %v880 = vsel %vm872, 65537, 0
        %v881 = vsel %vm873, 65537, 0
        %v882 = vsel %vm874, 65537, 0
        %v883 = vsel %vm875, 65537, 0
        %v885 = vshrl.u32 %v876, 16
        %v887 = vrot.slane %v885, 7
        %v888 = vshll.u32 %v876, 16
        %v890 = vor.u32 %v887, %v888
        %v891 = vrot.slane %v887, 4
        %v893 = vshrl.u32 %v877, 16
        %v895 = vrot.slane %v893, 7
        %v896 = vshll.u32 %v877, 16
        %v898 = vor.u32 %v895, %v896
        %v899 = vsel %vm734, %v891, %v898
        %v900 = vrot.slane %v895, 4
        %v902 = vshrl.u32 %v878, 16
        %v904 = vrot.slane %v902, 7
        %v905 = vshll.u32 %v878, 16
        %v907 = vor.u32 %v904, %v905
        %v908 = vsel %vm734, %v900, %v907
        %v909 = vrot.slane %v904, 4
        %v911 = vshrl.u32 %v879, 16
        %v913 = vrot.slane %v911, 7
        %v914 = vshll.u32 %v879, 16
        %v916 = vor.u32 %v913, %v914
        %v917 = vsel %vm734, %v909, %v916
        %v918 = vrot.slane %v913, 4
        %v920 = vshrl.u32 %v880, 16
        %v922 = vrot.slane %v920, 7
        %v923 = vshll.u32 %v880, 16
        %v925 = vor.u32 %v922, %v923
        %v926 = vsel %vm734, %v918, %v925
        %v927 = vrot.slane %v922, 4
        %v929 = vshrl.u32 %v881, 16
        %v931 = vrot.slane %v929, 7
        %v932 = vshll.u32 %v881, 16
        %v934 = vor.u32 %v931, %v932
        %v935 = vsel %vm734, %v927, %v934
        %v936 = vrot.slane %v931, 4
        %v938 = vshrl.u32 %v882, 16
        %v940 = vrot.slane %v938, 7
        %v941 = vshll.u32 %v882, 16
        %v943 = vor.u32 %v940, %v941
        %v944 = vsel %vm734, %v936, %v943
        %v945 = vrot.slane %v940, 4
        %v947 = vshrl.u32 %v883, 16
        %v949 = vrot.slane %v947, 7
        %v950 = vshll.u32 %v883, 16
        %v952 = vor.u32 %v949, %v950
        %v953 = vsel %vm734, %v945, %v952
        %v954 = vrot.slane %v949, 4
        %vm955 = vcmp.ne.s16.totalorder %v890, 0
        %vm956 = vcmp.ne.s16.totalorder %v899, 0
        %vm957 = vcmp.ne.s16.totalorder %v908, 0
        %vm958 = vcmp.ne.s16.totalorder %v917, 0
        %vm959 = vcmp.ne.s16.totalorder %v926, 0
        %vm960 = vcmp.ne.s16.totalorder %v935, 0
        %vm961 = vcmp.ne.s16.totalorder %v944, 0
        %vm962 = vcmp.ne.s16.totalorder %v953, 0
        %vm963 = vcmp.ne.s16.totalorder %v954, 0
        %v964 = vsel %vm955, %v843, 0
        %v965 = vsel %vm956, %v844, 0
        %v966 = vsel %vm957, %v845, 0
        %v967 = vsel %vm958, %v846, 0
        %v968 = vsel %vm959, %v847, 0
        %v969 = vsel %vm960, %v848, 0
        %v970 = vsel %vm961, %v849, 0
        %v971 = vsel %vm962, %v850, 0
        %v972 = vsel %vm963, %v851, 0
        %v974 = vshrl.u32 %v964, 16
        %v976 = vrot.slane %v974, 4
        %v977 = vshll.u32 %v964, 16
        %v979 = vrot.slane %v977, 5
        %v980 = vor.u32 %v976, %v979
        %v981 = vrot.slane %v980, 4
        %v983 = vshll.u32 %v965, 16
        %v985 = vrot.slane %v983, 5
        %v986 = vsel %vm634, %v981, %v985
        %v987 = vshrl.u32 %v965, 16
        %v989 = vrot.slane %v987, 4
        %v990 = vor.u32 %v989, %v985
        %v991 = vrot.slane %v990, 4
        %v993 = vshll.u32 %v966, 16
        %v995 = vrot.slane %v993, 5
        %v996 = vsel %vm634, %v991, %v995
        %v997 = vshrl.u32 %v966, 16
        %v999 = vrot.slane %v997, 4
        %v1000 = vor.u32 %v999, %v995
        %v1001 = vrot.slane %v1000, 4
        %v1003 = vshll.u32 %v967, 16
        %v1005 = vrot.slane %v1003, 5
        %v1006 = vsel %vm634, %v1001, %v1005
        %v1007 = vshrl.u32 %v967, 16
        %v1009 = vrot.slane %v1007, 4
        %v1010 = vor.u32 %v1009, %v1005
        %v1011 = vrot.slane %v1010, 4
        %v1013 = vshll.u32 %v968, 16
        %v1015 = vrot.slane %v1013, 5
        %v1016 = vsel %vm634, %v1011, %v1015
        %v1017 = vshrl.u32 %v968, 16
        %v1019 = vrot.slane %v1017, 4
        %v1020 = vor.u32 %v1019, %v1015
        %v1021 = vrot.slane %v1020, 4
        %v1023 = vshll.u32 %v969, 16
        %v1025 = vrot.slane %v1023, 5
        %v1026 = vsel %vm634, %v1021, %v1025
        %v1027 = vshrl.u32 %v969, 16
        %v1029 = vrot.slane %v1027, 4
        %v1030 = vor.u32 %v1029, %v1025
        %v1031 = vrot.slane %v1030, 4
        %v1033 = vshll.u32 %v970, 16
        %v1035 = vrot.slane %v1033, 5
        %v1036 = vsel %vm634, %v1031, %v1035
        %v1037 = vshrl.u32 %v970, 16
        %v1039 = vrot.slane %v1037, 4
        %v1040 = vor.u32 %v1039, %v1035
        %v1041 = vrot.slane %v1040, 4
        %v1043 = vshll.u32 %v971, 16
        %v1045 = vrot.slane %v1043, 5
        %v1046 = vsel %vm634, %v1041, %v1045
        %v1047 = vshrl.u32 %v971, 16
        %v1049 = vrot.slane %v1047, 4
        %v1050 = vor.u32 %v1049, %v1045
        %v1051 = vrot.slane %v1050, 4
        %v1053 = vshll.u32 %v972, 16
        %v1055 = vrot.slane %v1053, 5
        %v1056 = vsel %vm634, %v1051, %v1055
        %1065 = vst [vmem:[#allocation3 + $0x8] sm:$0xf] %v986
        %1066 = vst [vmem:[#allocation3 + $0x2c] sm:$0xf] %v996
        %1067 = vst [vmem:[#allocation3 + $0x50] sm:$0xf] %v1006
        %1068 = vst [vmem:[#allocation3 + $0x74] sm:$0xf] %v1016
        %1069 = vst [vmem:[#allocation3 + $0x98] sm:$0xf] %v1026
        %1070 = vst [vmem:[#allocation3 + $0xbc] sm:$0xf] %v1036
        %1071 = vst [vmem:[#allocation3 + $0xe0] sm:$0xf] %v1046
        %1072 = vst [vmem:[#allocation3 + $0x104] sm:$0xf] %v1056
        %v1073 = vld [vmem:[#allocation2 + $0x4] sm:$0x8]
        %v1074 = vld [vmem:[#allocation2 + $0x8] sm:$0xf]
        %v1075 = vld [vmem:[#allocation2 + $0xc] sm:$0xf]
        %v1076 = vld [vmem:[#allocation2 + $0x10] sm:$0xf]
        %v1077 = vld [vmem:[#allocation2 + $0x14] sm:$0xf]
        %v1078 = vld [vmem:[#allocation2 + $0x18] sm:$0xf]
        %v1079 = vld [vmem:[#allocation2 + $0x1c] sm:$0xf]
        %v1080 = vld [vmem:[#allocation2 + $0x20] sm:$0xf]
        %v1081 = vld [vmem:[#allocation2 + $0x24] sm:$0xf]
        %v1082 = vsel %vm714, %v1073, 0
        %v1083 = vsel %vm715, %v1074, 0
        %v1084 = vsel %vm716, %v1075, 0
        %v1085 = vsel %vm717, %v1076, 0
        %v1086 = vsel %vm718, %v1077, 0
        %v1087 = vsel %vm719, %v1078, 0
        %v1088 = vsel %vm720, %v1079, 0
        %v1089 = vsel %vm721, %v1080, 0
        %v1090 = vsel %vm722, %v1081, 0
        %v1092 = vshrl.u32 %v1082, 16
        %v1094 = vrot.slane %v1092, 7
        %v1095 = vrot.slane %v1094, 4
        %v1097 = vshrl.u32 %v1083, 16
        %v1099 = vrot.slane %v1097, 7
        %v1100 = vshll.u32 %v1083, 16
        %v1102 = vor.u32 %v1099, %v1100
        %v1103 = vsel %vm734, %v1095, %v1102
        %v1104 = vrot.slane %v1099, 4
        %v1106 = vshrl.u32 %v1084, 16
        %v1108 = vrot.slane %v1106, 7
        %v1109 = vshll.u32 %v1084, 16
        %v1111 = vor.u32 %v1108, %v1109
        %v1112 = vsel %vm734, %v1104, %v1111
        %v1113 = vrot.slane %v1108, 4
        %v1115 = vshrl.u32 %v1085, 16
        %v1117 = vrot.slane %v1115, 7
        %v1118 = vshll.u32 %v1085, 16
        %v1120 = vor.u32 %v1117, %v1118
        %v1121 = vsel %vm734, %v1113, %v1120
        %v1122 = vrot.slane %v1117, 4
        %v1124 = vshrl.u32 %v1086, 16
        %v1126 = vrot.slane %v1124, 7
        %v1127 = vshll.u32 %v1086, 16
        %v1129 = vor.u32 %v1126, %v1127
        %v1130 = vsel %vm734, %v1122, %v1129
        %v1131 = vrot.slane %v1126, 4
        %v1133 = vshrl.u32 %v1087, 16
        %v1135 = vrot.slane %v1133, 7
        %v1136 = vshll.u32 %v1087, 16
        %v1138 = vor.u32 %v1135, %v1136
        %v1139 = vsel %vm734, %v1131, %v1138
        %v1140 = vrot.slane %v1135, 4
        %v1142 = vshrl.u32 %v1088, 16
        %v1144 = vrot.slane %v1142, 7
        %v1145 = vshll.u32 %v1088, 16
        %v1147 = vor.u32 %v1144, %v1145
        %v1148 = vsel %vm734, %v1140, %v1147
        %v1149 = vrot.slane %v1144, 4
        %v1151 = vshrl.u32 %v1089, 16
        %v1153 = vrot.slane %v1151, 7
        %v1154 = vshll.u32 %v1089, 16
        %v1156 = vor.u32 %v1153, %v1154
        %v1157 = vsel %vm734, %v1149, %v1156
        %v1158 = vrot.slane %v1153, 4
        %v1160 = vshrl.u32 %v1090, 16
        %v1162 = vrot.slane %v1160, 7
        %v1163 = vshll.u32 %v1090, 16
        %v1165 = vor.u32 %v1162, %v1163
        %v1166 = vsel %vm734, %v1158, %v1165
        %1175 = vst [vmem:[#allocation3 + $0xc] sm:$0xf] %v1103
        %1176 = vst [vmem:[#allocation3 + $0x30] sm:$0xf] %v1112
        %1177 = vst [vmem:[#allocation3 + $0x54] sm:$0xf] %v1121
        %1178 = vst [vmem:[#allocation3 + $0x78] sm:$0xf] %v1130
        %1179 = vst [vmem:[#allocation3 + $0x9c] sm:$0xf] %v1139
        %1180 = vst [vmem:[#allocation3 + $0xc0] sm:$0xf] %v1148
        %1181 = vst [vmem:[#allocation3 + $0xe4] sm:$0xf] %v1157
        %1182 = vst [vmem:[#allocation3 + $0x108] sm:$0xf] %v1166
        %v1183 = vld [vmem:[#allocation2 + $0x8] sm:$0xf]
        %v1184 = vld [vmem:[#allocation2 + $0xc] sm:$0xf]
        %v1185 = vld [vmem:[#allocation2 + $0x10] sm:$0xf]
        %v1186 = vld [vmem:[#allocation2 + $0x14] sm:$0xf]
        %v1187 = vld [vmem:[#allocation2 + $0x18] sm:$0xf]
        %v1188 = vld [vmem:[#allocation2 + $0x1c] sm:$0xf]
        %v1189 = vld [vmem:[#allocation2 + $0x20] sm:$0xf]
        %v1190 = vld [vmem:[#allocation2 + $0x24] sm:$0xf]
        %1191 = vst [vmem:[#allocation3 + $0x10] sm:$0xf] %v1183
        %1192 = vst [vmem:[#allocation3 + $0x34] sm:$0xf] %v1184
        %1193 = vst [vmem:[#allocation3 + $0x58] sm:$0xf] %v1185
        %1194 = vst [vmem:[#allocation3 + $0x7c] sm:$0xf] %v1186
        %1195 = vst [vmem:[#allocation3 + $0xa0] sm:$0xf] %v1187
        %1196 = vst [vmem:[#allocation3 + $0xc4] sm:$0xf] %v1188
        %1197 = vst [vmem:[#allocation3 + $0xe8] sm:$0xf] %v1189
        %1198 = vst [vmem:[#allocation3 + $0x10c] sm:$0xf] %v1190
        %v1199 = vld [vmem:[#allocation2 + $0x8] sm:$0xf]
        %v1200 = vld [vmem:[#allocation2 + $0xc] sm:$0xf]
        %v1201 = vld [vmem:[#allocation2 + $0x10] sm:$0xf]
        %v1202 = vld [vmem:[#allocation2 + $0x14] sm:$0xf]
        %v1203 = vld [vmem:[#allocation2 + $0x18] sm:$0xf]
        %v1204 = vld [vmem:[#allocation2 + $0x1c] sm:$0xf]
        %v1205 = vld [vmem:[#allocation2 + $0x20] sm:$0xf]
        %v1206 = vld [vmem:[#allocation2 + $0x24] sm:$0xf]
        %v1207 = vld [vmem:[#allocation2 + $0x28] sm:$0x1]
        %v1208 = vsel %vm955, %v1199, 0
        %v1209 = vsel %vm956, %v1200, 0
        %v1210 = vsel %vm957, %v1201, 0
        %v1211 = vsel %vm958, %v1202, 0
        %v1212 = vsel %vm959, %v1203, 0
        %v1213 = vsel %vm960, %v1204, 0
        %v1214 = vsel %vm961, %v1205, 0
        %v1215 = vsel %vm962, %v1206, 0
        %v1216 = vsel %vm963, %v1207, 0
        %v1218 = vshrl.u32 %v1208, 16
        %v1220 = vrot.slane %v1218, 4
        %v1221 = vshll.u32 %v1208, 16
        %v1223 = vrot.slane %v1221, 5
        %v1224 = vor.u32 %v1220, %v1223
        %v1225 = vrot.slane %v1224, 4
        %v1227 = vshll.u32 %v1209, 16
        %v1229 = vrot.slane %v1227, 5
        %v1230 = vsel %vm634, %v1225, %v1229
        %v1231 = vshrl.u32 %v1209, 16
        %v1233 = vrot.slane %v1231, 4
        %v1234 = vor.u32 %v1233, %v1229
        %v1235 = vrot.slane %v1234, 4
        %v1237 = vshll.u32 %v1210, 16
        %v1239 = vrot.slane %v1237, 5
        %v1240 = vsel %vm634, %v1235, %v1239
        %v1241 = vshrl.u32 %v1210, 16
        %v1243 = vrot.slane %v1241, 4
        %v1244 = vor.u32 %v1243, %v1239
        %v1245 = vrot.slane %v1244, 4
        %v1247 = vshll.u32 %v1211, 16
        %v1249 = vrot.slane %v1247, 5
        %v1250 = vsel %vm634, %v1245, %v1249
        %v1251 = vshrl.u32 %v1211, 16
        %v1253 = vrot.slane %v1251, 4
        %v1254 = vor.u32 %v1253, %v1249
        %v1255 = vrot.slane %v1254, 4
        %v1257 = vshll.u32 %v1212, 16
        %v1259 = vrot.slane %v1257, 5
        %v1260 = vsel %vm634, %v1255, %v1259
        %v1261 = vshrl.u32 %v1212, 16
        %v1263 = vrot.slane %v1261, 4
        %v1264 = vor.u32 %v1263, %v1259
        %v1265 = vrot.slane %v1264, 4
        %v1267 = vshll.u32 %v1213, 16
        %v1269 = vrot.slane %v1267, 5
        %v1270 = vsel %vm634, %v1265, %v1269
        %v1271 = vshrl.u32 %v1213, 16
        %v1273 = vrot.slane %v1271, 4
        %v1274 = vor.u32 %v1273, %v1269
        %v1275 = vrot.slane %v1274, 4
        %v1277 = vshll.u32 %v1214, 16
        %v1279 = vrot.slane %v1277, 5
        %v1280 = vsel %vm634, %v1275, %v1279
        %v1281 = vshrl.u32 %v1214, 16
        %v1283 = vrot.slane %v1281, 4
        %v1284 = vor.u32 %v1283, %v1279
        %v1285 = vrot.slane %v1284, 4
        %v1287 = vshll.u32 %v1215, 16
        %v1289 = vrot.slane %v1287, 5
        %v1290 = vsel %vm634, %v1285, %v1289
        %v1291 = vshrl.u32 %v1215, 16
        %v1293 = vrot.slane %v1291, 4
        %v1294 = vor.u32 %v1293, %v1289
        %v1295 = vrot.slane %v1294, 4
        %v1297 = vshll.u32 %v1216, 16
        %v1299 = vrot.slane %v1297, 5
        %v1300 = vsel %vm634, %v1295, %v1299
        %1309 = vst [vmem:[#allocation3 + $0x14] sm:$0xf] %v1230
        %1310 = vst [vmem:[#allocation3 + $0x38] sm:$0xf] %v1240
        %1311 = vst [vmem:[#allocation3 + $0x5c] sm:$0xf] %v1250
        %1312 = vst [vmem:[#allocation3 + $0x80] sm:$0xf] %v1260
        %1313 = vst [vmem:[#allocation3 + $0xa4] sm:$0xf] %v1270
        %1314 = vst [vmem:[#allocation3 + $0xc8] sm:$0xf] %v1280
        %1315 = vst [vmem:[#allocation3 + $0xec] sm:$0xf] %v1290
        %1316 = vst [vmem:[#allocation3 + $0x110] sm:$0xf] %v1300
        %v1317 = vld [vmem:[#allocation2 + $0x8] sm:$0x8]
        %v1318 = vld [vmem:[#allocation2 + $0xc] sm:$0xf]
        %v1319 = vld [vmem:[#allocation2 + $0x10] sm:$0xf]
        %v1320 = vld [vmem:[#allocation2 + $0x14] sm:$0xf]
        %v1321 = vld [vmem:[#allocation2 + $0x18] sm:$0xf]
        %v1322 = vld [vmem:[#allocation2 + $0x1c] sm:$0xf]
        %v1323 = vld [vmem:[#allocation2 + $0x20] sm:$0xf]
        %v1324 = vld [vmem:[#allocation2 + $0x24] sm:$0xf]
        %v1325 = vld [vmem:[#allocation2 + $0x28] sm:$0xf]
        %v1326 = vsel %vm714, %v1317, 0
        %v1327 = vsel %vm715, %v1318, 0
        %v1328 = vsel %vm716, %v1319, 0
        %v1329 = vsel %vm717, %v1320, 0
        %v1330 = vsel %vm718, %v1321, 0
        %v1331 = vsel %vm719, %v1322, 0
        %v1332 = vsel %vm720, %v1323, 0
        %v1333 = vsel %vm721, %v1324, 0
        %v1334 = vsel %vm722, %v1325, 0
        %v1336 = vshrl.u32 %v1326, 16
        %v1338 = vrot.slane %v1336, 7
        %v1339 = vrot.slane %v1338, 4
        %v1341 = vshrl.u32 %v1327, 16
        %v1343 = vrot.slane %v1341, 7
        %v1344 = vshll.u32 %v1327, 16
        %v1346 = vor.u32 %v1343, %v1344
        %v1347 = vsel %vm734, %v1339, %v1346
        %v1348 = vrot.slane %v1343, 4
        %v1350 = vshrl.u32 %v1328, 16
        %v1352 = vrot.slane %v1350, 7
        %v1353 = vshll.u32 %v1328, 16
        %v1355 = vor.u32 %v1352, %v1353
        %v1356 = vsel %vm734, %v1348, %v1355
        %v1357 = vrot.slane %v1352, 4
        %v1359 = vshrl.u32 %v1329, 16
        %v1361 = vrot.slane %v1359, 7
        %v1362 = vshll.u32 %v1329, 16
        %v1364 = vor.u32 %v1361, %v1362
        %v1365 = vsel %vm734, %v1357, %v1364
        %v1366 = vrot.slane %v1361, 4
        %v1368 = vshrl.u32 %v1330, 16
        %v1370 = vrot.slane %v1368, 7
        %v1371 = vshll.u32 %v1330, 16
        %v1373 = vor.u32 %v1370, %v1371
        %v1374 = vsel %vm734, %v1366, %v1373
        %v1375 = vrot.slane %v1370, 4
        %v1377 = vshrl.u32 %v1331, 16
        %v1379 = vrot.slane %v1377, 7
        %v1380 = vshll.u32 %v1331, 16
        %v1382 = vor.u32 %v1379, %v1380
        %v1383 = vsel %vm734, %v1375, %v1382
        %v1384 = vrot.slane %v1379, 4
        %v1386 = vshrl.u32 %v1332, 16
        %v1388 = vrot.slane %v1386, 7
        %v1389 = vshll.u32 %v1332, 16
        %v1391 = vor.u32 %v1388, %v1389
        %v1392 = vsel %vm734, %v1384, %v1391
        %v1393 = vrot.slane %v1388, 4
        %v1395 = vshrl.u32 %v1333, 16
        %v1397 = vrot.slane %v1395, 7
        %v1398 = vshll.u32 %v1333, 16
        %v1400 = vor.u32 %v1397, %v1398
        %v1401 = vsel %vm734, %v1393, %v1400
        %v1402 = vrot.slane %v1397, 4
        %v1404 = vshrl.u32 %v1334, 16
        %v1406 = vrot.slane %v1404, 7
        %v1407 = vshll.u32 %v1334, 16
        %v1409 = vor.u32 %v1406, %v1407
        %v1410 = vsel %vm734, %v1402, %v1409
        %1419 = vst [vmem:[#allocation3 + $0x18] sm:$0xf] %v1347
        %1420 = vst [vmem:[#allocation3 + $0x3c] sm:$0xf] %v1356
        %1421 = vst [vmem:[#allocation3 + $0x60] sm:$0xf] %v1365
        %1422 = vst [vmem:[#allocation3 + $0x84] sm:$0xf] %v1374
        %1423 = vst [vmem:[#allocation3 + $0xa8] sm:$0xf] %v1383
        %1424 = vst [vmem:[#allocation3 + $0xcc] sm:$0xf] %v1392
        %1425 = vst [vmem:[#allocation3 + $0xf0] sm:$0xf] %v1401
        %1426 = vst [vmem:[#allocation3 + $0x114] sm:$0xf] %v1410
        %v1427 = vld [vmem:[#allocation2 + $0xc] sm:$0xf]
        %v1428 = vld [vmem:[#allocation2 + $0x10] sm:$0xf]
        %v1429 = vld [vmem:[#allocation2 + $0x14] sm:$0xf]
        %v1430 = vld [vmem:[#allocation2 + $0x18] sm:$0xf]
        %v1431 = vld [vmem:[#allocation2 + $0x1c] sm:$0xf]
        %v1432 = vld [vmem:[#allocation2 + $0x20] sm:$0xf]
        %v1433 = vld [vmem:[#allocation2 + $0x24] sm:$0xf]
        %v1434 = vld [vmem:[#allocation2 + $0x28] sm:$0xf]
        %1435 = vst [vmem:[#allocation3 + $0x1c] sm:$0xf] %v1427
        %1436 = vst [vmem:[#allocation3 + $0x40] sm:$0xf] %v1428
        %1437 = vst [vmem:[#allocation3 + $0x64] sm:$0xf] %v1429
        %1438 = vst [vmem:[#allocation3 + $0x88] sm:$0xf] %v1430
        %1439 = vst [vmem:[#allocation3 + $0xac] sm:$0xf] %v1431
        %1440 = vst [vmem:[#allocation3 + $0xd0] sm:$0xf] %v1432
        %1441 = vst [vmem:[#allocation3 + $0xf4] sm:$0xf] %v1433
        %1442 = vst [vmem:[#allocation3 + $0x118] sm:$0xf] %v1434
        %v1443 = vld [vmem:[#allocation2 + $0xc] sm:$0xf]
        %v1444 = vld [vmem:[#allocation2 + $0x10] sm:$0xf]
        %v1445 = vld [vmem:[#allocation2 + $0x14] sm:$0xf]
        %v1446 = vld [vmem:[#allocation2 + $0x18] sm:$0xf]
        %v1447 = vld [vmem:[#allocation2 + $0x1c] sm:$0xf]
        %v1448 = vld [vmem:[#allocation2 + $0x20] sm:$0xf]
        %v1449 = vld [vmem:[#allocation2 + $0x24] sm:$0xf]
        %v1450 = vld [vmem:[#allocation2 + $0x28] sm:$0xf]
        %v1451 = vld [vmem:[#allocation2 + $0x2c] sm:$0x1]
        %v1452 = vsel %vm955, %v1443, 0
        %v1453 = vsel %vm956, %v1444, 0
        %v1454 = vsel %vm957, %v1445, 0
        %v1455 = vsel %vm958, %v1446, 0
        %v1456 = vsel %vm959, %v1447, 0
        %v1457 = vsel %vm960, %v1448, 0
        %v1458 = vsel %vm961, %v1449, 0
        %v1459 = vsel %vm962, %v1450, 0
        %v1460 = vsel %vm963, %v1451, 0
        %v1462 = vshrl.u32 %v1452, 16
        %v1464 = vrot.slane %v1462, 4
        %v1465 = vshll.u32 %v1452, 16
        %v1467 = vrot.slane %v1465, 5
        %v1468 = vor.u32 %v1464, %v1467
        %v1469 = vrot.slane %v1468, 4
        %v1471 = vshll.u32 %v1453, 16
        %v1473 = vrot.slane %v1471, 5
        %v1474 = vsel %vm634, %v1469, %v1473
        %v1475 = vshrl.u32 %v1453, 16
        %v1477 = vrot.slane %v1475, 4
        %v1478 = vor.u32 %v1477, %v1473
        %v1479 = vrot.slane %v1478, 4
        %v1481 = vshll.u32 %v1454, 16
        %v1483 = vrot.slane %v1481, 5
        %v1484 = vsel %vm634, %v1479, %v1483
        %v1485 = vshrl.u32 %v1454, 16
        %v1487 = vrot.slane %v1485, 4
        %v1488 = vor.u32 %v1487, %v1483
        %v1489 = vrot.slane %v1488, 4
        %v1491 = vshll.u32 %v1455, 16
        %v1493 = vrot.slane %v1491, 5
        %v1494 = vsel %vm634, %v1489, %v1493
        %v1495 = vshrl.u32 %v1455, 16
        %v1497 = vrot.slane %v1495, 4
        %v1498 = vor.u32 %v1497, %v1493
        %v1499 = vrot.slane %v1498, 4
        %v1501 = vshll.u32 %v1456, 16
        %v1503 = vrot.slane %v1501, 5
        %v1504 = vsel %vm634, %v1499, %v1503
        %v1505 = vshrl.u32 %v1456, 16
        %v1507 = vrot.slane %v1505, 4
        %v1508 = vor.u32 %v1507, %v1503
        %v1509 = vrot.slane %v1508, 4
        %v1511 = vshll.u32 %v1457, 16
        %v1513 = vrot.slane %v1511, 5
        %v1514 = vsel %vm634, %v1509, %v1513
        %v1515 = vshrl.u32 %v1457, 16
        %v1517 = vrot.slane %v1515, 4
        %v1518 = vor.u32 %v1517, %v1513
        %v1519 = vrot.slane %v1518, 4
        %v1521 = vshll.u32 %v1458, 16
        %v1523 = vrot.slane %v1521, 5
        %v1524 = vsel %vm634, %v1519, %v1523
        %v1525 = vshrl.u32 %v1458, 16
        %v1527 = vrot.slane %v1525, 4
        %v1528 = vor.u32 %v1527, %v1523
        %v1529 = vrot.slane %v1528, 4
        %v1531 = vshll.u32 %v1459, 16
        %v1533 = vrot.slane %v1531, 5
        %v1534 = vsel %vm634, %v1529, %v1533
        %v1535 = vshrl.u32 %v1459, 16
        %v1537 = vrot.slane %v1535, 4
        %v1538 = vor.u32 %v1537, %v1533
        %v1539 = vrot.slane %v1538, 4
        %v1541 = vshll.u32 %v1460, 16
        %v1543 = vrot.slane %v1541, 5
        %v1544 = vsel %vm634, %v1539, %v1543
        %1553 = vst [vmem:[#allocation3 + $0x20] sm:$0xf] %v1474
        %1554 = vst [vmem:[#allocation3 + $0x44] sm:$0xf] %v1484
        %1555 = vst [vmem:[#allocation3 + $0x68] sm:$0xf] %v1494
        %1556 = vst [vmem:[#allocation3 + $0x8c] sm:$0xf] %v1504
        %1557 = vst [vmem:[#allocation3 + $0xb0] sm:$0xf] %v1514
        %1558 = vst [vmem:[#allocation3 + $0xd4] sm:$0xf] %v1524
        %1559 = vst [vmem:[#allocation3 + $0xf8] sm:$0xf] %v1534
        %1560 = vst [vmem:[#allocation3 + $0x11c] sm:$0xf] %v1544
        %v1561 = vld [vmem:[#allocation3] sm:$0xff]
        %v1562 = vld [vmem:[#allocation3 + $0x8] sm:$0xff]
        %v1563 = vld [vmem:[#allocation3 + $0x10] sm:$0xff]
        %v1564 = vld [vmem:[#allocation3 + $0x18] sm:$0xff]
        %v1565 = vld [vmem:[#allocation3 + $0x20] sm:$0xf]
        %v1566 = vld [vmem:[#allocation3 + $0x24] sm:$0xff]
        %v1567 = vld [vmem:[#allocation3 + $0x2c] sm:$0xff]
        %v1568 = vld [vmem:[#allocation3 + $0x34] sm:$0xff]
        %v1569 = vld [vmem:[#allocation3 + $0x3c] sm:$0xff]
        %v1570 = vld [vmem:[#allocation3 + $0x44] sm:$0xf]
        %v1571 = vld [vmem:[#allocation3 + $0x48] sm:$0xff]
        %v1572 = vld [vmem:[#allocation3 + $0x50] sm:$0xff]
        %v1573 = vld [vmem:[#allocation3 + $0x58] sm:$0xff]
        %v1574 = vld [vmem:[#allocation3 + $0x60] sm:$0xff]
        %v1575 = vld [vmem:[#allocation3 + $0x68] sm:$0xf]
        %v1576 = vld [vmem:[#allocation3 + $0x6c] sm:$0xff]
        %v1577 = vld [vmem:[#allocation3 + $0x74] sm:$0xff]
        %v1578 = vld [vmem:[#allocation3 + $0x7c] sm:$0xff]
        %v1579 = vld [vmem:[#allocation3 + $0x84] sm:$0xff]
        %v1580 = vld [vmem:[#allocation3 + $0x8c] sm:$0xf]
        %v1581 = vld [vmem:[#allocation3 + $0x90] sm:$0xff]
        %v1582 = vld [vmem:[#allocation3 + $0x98] sm:$0xff]
        %v1583 = vld [vmem:[#allocation3 + $0xa0] sm:$0xff]
        %v1584 = vld [vmem:[#allocation3 + $0xa8] sm:$0xff]
        %v1585 = vld [vmem:[#allocation3 + $0xb0] sm:$0xf]
        %v1586 = vld [vmem:[#allocation3 + $0xb4] sm:$0xff]
        %v1587 = vld [vmem:[#allocation3 + $0xbc] sm:$0xff]
        %v1588 = vld [vmem:[#allocation3 + $0xc4] sm:$0xff]
        %v1589 = vld [vmem:[#allocation3 + $0xcc] sm:$0xff]
        %v1590 = vld [vmem:[#allocation3 + $0xd4] sm:$0xf]
        %v1591 = vld [vmem:[#allocation3 + $0xd8] sm:$0xff]
        %v1592 = vld [vmem:[#allocation3 + $0xe0] sm:$0xff]
        %v1593 = vld [vmem:[#allocation3 + $0xe8] sm:$0xff]
        %v1594 = vld [vmem:[#allocation3 + $0xf0] sm:$0xff]
        %v1595 = vld [vmem:[#allocation3 + $0xf8] sm:$0xf]
        %v1596 = vld [vmem:[#allocation3 + $0xfc] sm:$0xff]
        %v1597 = vld [vmem:[#allocation3 + $0x104] sm:$0xff]
        %v1598 = vld [vmem:[#allocation3 + $0x10c] sm:$0xff]
        %v1599 = vld [vmem:[#allocation3 + $0x114] sm:$0xff]
        %v1600 = vld [vmem:[#allocation3 + $0x11c] sm:$0xf]
        %v1601 = vld [vmem:[#allocation4] sm:$0xf]
        %v1602 = vld [vmem:[#allocation4 + $0x4] sm:$0xf]
        %v1603 = vld [vmem:[#allocation4 + $0x8] sm:$0xf]
        %v1604 = vld [vmem:[#allocation4 + $0xc] sm:$0xf]
        %v1605 = vld [vmem:[#allocation4 + $0x10] sm:$0xf]
        %v1606 = vld [vmem:[#allocation4 + $0x14] sm:$0xf]
        %v1607 = vld [vmem:[#allocation4 + $0x18] sm:$0xf]
        %v1608 = vld [vmem:[#allocation4 + $0x1c] sm:$0xf]
        %v1609 = vld [vmem:[#allocation4 + $0x20] sm:$0xf]
        %v1610 = vld [vmem:[#allocation4 + $0x24] sm:$0xf]
        %v1611 = vld [vmem:[#allocation4 + $0x28] sm:$0xf]
        %v1612 = vld [vmem:[#allocation4 + $0x2c] sm:$0xf]
        %v1613 = vld [vmem:[#allocation4 + $0x30] sm:$0xf]
        %v1614 = vld [vmem:[#allocation4 + $0x34] sm:$0xf]
        %v1615 = vld [vmem:[#allocation4 + $0x38] sm:$0xf]
        %v1616 = vld [vmem:[#allocation4 + $0x3c] sm:$0xf]
        %v1617 = vld [vmem:[#allocation4 + $0x40] sm:$0xf]
        %v1618 = vld [vmem:[#allocation4 + $0x44] sm:$0xf]
        %v1619 = vld [vmem:[#allocation4 + $0x48] sm:$0xf]
        %v1620 = vld [vmem:[#allocation4 + $0x4c] sm:$0xf]
        %v1621 = vld [vmem:[#allocation4 + $0x50] sm:$0xf]
        %v1622 = vld [vmem:[#allocation4 + $0x54] sm:$0xf]
        %v1623 = vld [vmem:[#allocation4 + $0x58] sm:$0xf]
        %v1624 = vld [vmem:[#allocation4 + $0x5c] sm:$0xf]
        %v1625 = vld [vmem:[#allocation4 + $0x60] sm:$0xf]
        %v1626 = vld [vmem:[#allocation4 + $0x64] sm:$0xf]
        %v1627 = vld [vmem:[#allocation4 + $0x68] sm:$0xf]
        %v1628 = vld [vmem:[#allocation4 + $0x6c] sm:$0xf]
        %v1629 = vld [vmem:[#allocation4 + $0x70] sm:$0xf]
        %v1630 = vld [vmem:[#allocation4 + $0x74] sm:$0xf]
        %v1631 = vld [vmem:[#allocation4 + $0x78] sm:$0xf]
        %v1632 = vld [vmem:[#allocation4 + $0x7c] sm:$0xf]
        %v1633 = vld [vmem:[#allocation4 + $0x80] sm:$0xf]
        %v1634 = vld [vmem:[#allocation4 + $0x84] sm:$0xf]
        %v1635 = vld [vmem:[#allocation4 + $0x88] sm:$0xf]
        %v1636 = vld [vmem:[#allocation4 + $0x8c] sm:$0xf]
        %v1637 = vld [vmem:[#allocation4 + $0x90] sm:$0xf]
        %v1638 = vld [vmem:[#allocation4 + $0x94] sm:$0xf]
        %v1639 = vld [vmem:[#allocation4 + $0x98] sm:$0xf]
        %v1640 = vld [vmem:[#allocation4 + $0x9c] sm:$0xf]
        %v1641 = vld [vmem:[#allocation4 + $0xa0] sm:$0xf]
        %v1642 = vld [vmem:[#allocation4 + $0xa4] sm:$0xf]
        %v1643 = vld [vmem:[#allocation4 + $0xa8] sm:$0xf]
        %v1644 = vld [vmem:[#allocation4 + $0xac] sm:$0xf]
        %v1645 = vld [vmem:[#allocation4 + $0xb0] sm:$0xf]
        %v1646 = vld [vmem:[#allocation4 + $0xb4] sm:$0xf]
        %v1647 = vld [vmem:[#allocation4 + $0xb8] sm:$0xf]
        %v1648 = vld [vmem:[#allocation4 + $0xbc] sm:$0xf]
        %v1649 = vld [vmem:[#allocation4 + $0xc0] sm:$0xf]
        %v1650 = vld [vmem:[#allocation4 + $0xc4] sm:$0xf]
        %v1651 = vld [vmem:[#allocation4 + $0xc8] sm:$0xf]
        %v1652 = vld [vmem:[#allocation4 + $0xcc] sm:$0xf]
        %v1653 = vld [vmem:[#allocation4 + $0xd0] sm:$0xf]
        %v1654 = vld [vmem:[#allocation4 + $0xd4] sm:$0xf]
        %v1655 = vld [vmem:[#allocation4 + $0xd8] sm:$0xf]
        %v1656 = vld [vmem:[#allocation4 + $0xdc] sm:$0xf]
        %v1657 = vld [vmem:[#allocation4 + $0xe0] sm:$0xf]
        %v1658 = vld [vmem:[#allocation4 + $0xe4] sm:$0xf]
        %v1659 = vld [vmem:[#allocation4 + $0xe8] sm:$0xf]
        %v1660 = vld [vmem:[#allocation4 + $0xec] sm:$0xf]
        %v1661 = vld [vmem:[#allocation4 + $0xf0] sm:$0xf]
        %v1662 = vld [vmem:[#allocation4 + $0xf4] sm:$0xf]
        %v1663 = vld [vmem:[#allocation4 + $0xf8] sm:$0xf]
        %v1664 = vld [vmem:[#allocation4 + $0xfc] sm:$0xf]
        %v1665 = vld [vmem:[#allocation4 + $0x100] sm:$0xf]
        %v1666 = vld [vmem:[#allocation4 + $0x104] sm:$0xf]
        %v1667 = vld [vmem:[#allocation4 + $0x108] sm:$0xf]
        %v1668 = vld [vmem:[#allocation4 + $0x10c] sm:$0xf]
        %v1669 = vld [vmem:[#allocation4 + $0x110] sm:$0xf]
        %v1670 = vld [vmem:[#allocation4 + $0x114] sm:$0xf]
        %v1671 = vld [vmem:[#allocation4 + $0x118] sm:$0xf]
        %v1672 = vld [vmem:[#allocation4 + $0x11c] sm:$0xf]
        %v1673 = vld [vmem:[#allocation4 + $0x120] sm:$0xf]
        %v1674 = vld [vmem:[#allocation4 + $0x124] sm:$0xf]
        %v1675 = vld [vmem:[#allocation4 + $0x128] sm:$0xf]
        %v1676 = vld [vmem:[#allocation4 + $0x12c] sm:$0xf]
        %v1677 = vld [vmem:[#allocation4 + $0x130] sm:$0xf]
        %v1678 = vld [vmem:[#allocation4 + $0x134] sm:$0xf]
        %v1679 = vld [vmem:[#allocation4 + $0x138] sm:$0xf]
        %v1680 = vld [vmem:[#allocation4 + $0x13c] sm:$0xf]
        %v1681 = vld [vmem:[#allocation4 + $0x140] sm:$0xf]
        %v1682 = vld [vmem:[#allocation4 + $0x144] sm:$0xf]
        %v1683 = vld [vmem:[#allocation4 + $0x148] sm:$0xf]
        %v1684 = vld [vmem:[#allocation4 + $0x14c] sm:$0xf]
        %v1685 = vld [vmem:[#allocation4 + $0x150] sm:$0xf]
        %v1686 = vld [vmem:[#allocation4 + $0x154] sm:$0xf]
        %v1687 = vld [vmem:[#allocation4 + $0x158] sm:$0xf]
        %v1688 = vld [vmem:[#allocation4 + $0x15c] sm:$0xf]
        %v1689 = vld [vmem:[#allocation4 + $0x160] sm:$0xf]
        %v1690 = vld [vmem:[#allocation4 + $0x164] sm:$0xf]
        %v1691 = vld [vmem:[#allocation4 + $0x168] sm:$0xf]
        %v1692 = vld [vmem:[#allocation4 + $0x16c] sm:$0xf]
        %v1693 = vld [vmem:[#allocation4 + $0x170] sm:$0xf]
        %v1694 = vld [vmem:[#allocation4 + $0x174] sm:$0xf]
        %v1695 = vld [vmem:[#allocation4 + $0x178] sm:$0xf]
        %v1696 = vld [vmem:[#allocation4 + $0x17c] sm:$0xf]
        %v1697 = vld [vmem:[#allocation4 + $0x180] sm:$0xf]
        %v1698 = vld [vmem:[#allocation4 + $0x184] sm:$0xf]
        %v1699 = vld [vmem:[#allocation4 + $0x188] sm:$0xf]
        %v1700 = vld [vmem:[#allocation4 + $0x18c] sm:$0xf]
        %v1701 = vld [vmem:[#allocation4 + $0x190] sm:$0xf]
        %v1702 = vld [vmem:[#allocation4 + $0x194] sm:$0xf]
        %v1703 = vld [vmem:[#allocation4 + $0x198] sm:$0xf]
        %v1704 = vld [vmem:[#allocation4 + $0x19c] sm:$0xf]
        %v1705 = vld [vmem:[#allocation4 + $0x1a0] sm:$0xf]
        %v1706 = vld [vmem:[#allocation4 + $0x1a4] sm:$0xf]
        %v1707 = vld [vmem:[#allocation4 + $0x1a8] sm:$0xf]
        %v1708 = vld [vmem:[#allocation4 + $0x1ac] sm:$0xf]
        %v1709 = vld [vmem:[#allocation4 + $0x1b0] sm:$0xf]
        %v1710 = vld [vmem:[#allocation4 + $0x1b4] sm:$0xf]
        %v1711 = vld [vmem:[#allocation4 + $0x1b8] sm:$0xf]
        %v1712 = vld [vmem:[#allocation4 + $0x1bc] sm:$0xf]
        %v1713 = vld [vmem:[#allocation4 + $0x1c0] sm:$0xf]
        %v1714 = vld [vmem:[#allocation4 + $0x1c4] sm:$0xf]
        %v1715 = vld [vmem:[#allocation4 + $0x1c8] sm:$0xf]
        %v1716 = vld [vmem:[#allocation4 + $0x1cc] sm:$0xf]
        %v1717 = vld [vmem:[#allocation4 + $0x1d0] sm:$0xf]
        %v1718 = vld [vmem:[#allocation4 + $0x1d4] sm:$0xf]
        %v1719 = vld [vmem:[#allocation4 + $0x1d8] sm:$0xf]
        %v1720 = vld [vmem:[#allocation4 + $0x1dc] sm:$0xf]
        %v1721 = vld [vmem:[#allocation4 + $0x1e0] sm:$0xf]
        %v1722 = vld [vmem:[#allocation4 + $0x1e4] sm:$0xf]
        %v1723 = vld [vmem:[#allocation4 + $0x1e8] sm:$0xf]
        %v1724 = vld [vmem:[#allocation4 + $0x1ec] sm:$0xf]
        %v1725 = vld [vmem:[#allocation4 + $0x1f0] sm:$0xf]
        %v1726 = vld [vmem:[#allocation4 + $0x1f4] sm:$0xf]
        %v1727 = vld [vmem:[#allocation4 + $0x1f8] sm:$0xf]
        %v1728 = vld [vmem:[#allocation4 + $0x1fc] sm:$0xf]
        %v1729 = vld [vmem:[#allocation4 + $0x200] sm:$0xf]
        %v1730 = vld [vmem:[#allocation4 + $0x204] sm:$0xf]
        %v1731 = vld [vmem:[#allocation4 + $0x208] sm:$0xf]
        %v1732 = vld [vmem:[#allocation4 + $0x20c] sm:$0xf]
        %v1733 = vld [vmem:[#allocation4 + $0x210] sm:$0xf]
        %v1734 = vld [vmem:[#allocation4 + $0x214] sm:$0xf]
        %v1735 = vld [vmem:[#allocation4 + $0x218] sm:$0xf]
        %v1736 = vld [vmem:[#allocation4 + $0x21c] sm:$0xf]
        %v1737 = vld [vmem:[#allocation4 + $0x220] sm:$0xf]
        %v1738 = vld [vmem:[#allocation4 + $0x224] sm:$0xf]
        %v1739 = vld [vmem:[#allocation4 + $0x228] sm:$0xf]
        %v1740 = vld [vmem:[#allocation4 + $0x22c] sm:$0xf]
        %v1741 = vld [vmem:[#allocation4 + $0x230] sm:$0xf]
        %v1742 = vld [vmem:[#allocation4 + $0x234] sm:$0xf]
        %v1743 = vld [vmem:[#allocation4 + $0x238] sm:$0xf]
        %v1744 = vld [vmem:[#allocation4 + $0x23c] sm:$0xf]
        %v1745 = vld [vmem:[%s4] sm:$0x1]
        %v1747 = vlaneseq
        %v1748 = vshrl.u32 %v1747, 7
        %v1749 = vsub.s32 0, %v1748
        %v1750 = vrot.slane %v1745, %v1749
        %v1792 = vunpack.c.l.b16 %v1561
        %v1793 = vunpack.c.h.b16 %v1561
        %v1794 = vunpack.c.l.b16 %v1562
        %v1795 = vunpack.c.h.b16 %v1562
        %v1796 = vunpack.c.l.b16 %v1563
        %v1797 = vunpack.c.h.b16 %v1563
        %v1798 = vunpack.c.l.b16 %v1564
        %v1799 = vunpack.c.h.b16 %v1564
        %v1800 = vunpack.c.l.b16 %v1565
        %v1801 = vunpack.c.l.b16 %v1566
        %v1802 = vunpack.c.h.b16 %v1566
        %v1803 = vunpack.c.l.b16 %v1567
        %v1804 = vunpack.c.h.b16 %v1567
        %v1805 = vunpack.c.l.b16 %v1568
        %v1806 = vunpack.c.h.b16 %v1568
        %v1807 = vunpack.c.l.b16 %v1569
        %v1808 = vunpack.c.h.b16 %v1569
        %v1809 = vunpack.c.l.b16 %v1570
        %v1810 = vunpack.c.l.b16 %v1571
        %v1811 = vunpack.c.h.b16 %v1571
        %v1812 = vunpack.c.l.b16 %v1572
        %v1813 = vunpack.c.h.b16 %v1572
        %v1814 = vunpack.c.l.b16 %v1573
        %v1815 = vunpack.c.h.b16 %v1573
        %v1816 = vunpack.c.l.b16 %v1574
        %v1817 = vunpack.c.h.b16 %v1574
        %v1818 = vunpack.c.l.b16 %v1575
        %v1819 = vunpack.c.l.b16 %v1576
        %v1820 = vunpack.c.h.b16 %v1576
        %v1821 = vunpack.c.l.b16 %v1577
        %v1822 = vunpack.c.h.b16 %v1577
        %v1823 = vunpack.c.l.b16 %v1578
        %v1824 = vunpack.c.h.b16 %v1578
        %v1825 = vunpack.c.l.b16 %v1579
        %v1826 = vunpack.c.h.b16 %v1579
        %v1827 = vunpack.c.l.b16 %v1580
        %v1828 = vunpack.c.l.b16 %v1581
        %v1829 = vunpack.c.h.b16 %v1581
        %v1830 = vunpack.c.l.b16 %v1582
        %v1831 = vunpack.c.h.b16 %v1582
        %v1832 = vunpack.c.l.b16 %v1583
        %v1833 = vunpack.c.h.b16 %v1583
        %v1834 = vunpack.c.l.b16 %v1584
        %v1835 = vunpack.c.h.b16 %v1584
        %v1836 = vunpack.c.l.b16 %v1585
        %v1837 = vunpack.c.l.b16 %v1586
        %v1838 = vunpack.c.h.b16 %v1586
        %v1839 = vunpack.c.l.b16 %v1587
        %v1840 = vunpack.c.h.b16 %v1587
        %v1841 = vunpack.c.l.b16 %v1588
        %v1842 = vunpack.c.h.b16 %v1588
        %v1843 = vunpack.c.l.b16 %v1589
        %v1844 = vunpack.c.h.b16 %v1589
        %v1845 = vunpack.c.l.b16 %v1590
        %v1846 = vunpack.c.l.b16 %v1591
        %v1847 = vunpack.c.h.b16 %v1591
        %v1848 = vunpack.c.l.b16 %v1592
        %v1849 = vunpack.c.h.b16 %v1592
        %v1850 = vunpack.c.l.b16 %v1593
        %v1851 = vunpack.c.h.b16 %v1593
        %v1852 = vunpack.c.l.b16 %v1594
        %v1853 = vunpack.c.h.b16 %v1594
        %v1854 = vunpack.c.l.b16 %v1595
        %v1855 = vunpack.c.l.b16 %v1596
        %v1856 = vunpack.c.h.b16 %v1596
        %v1857 = vunpack.c.l.b16 %v1597
        %v1858 = vunpack.c.h.b16 %v1597
        %v1859 = vunpack.c.l.b16 %v1598
        %v1860 = vunpack.c.h.b16 %v1598
        %v1861 = vunpack.c.l.b16 %v1599
        %v1862 = vunpack.c.h.b16 %v1599
        %v1863 = vunpack.c.l.b16 %v1600
        %v1864 = vpack.c.b16 %v1801, %v1792
        %v1865 = vpack.c.b16 %v1802, %v1793
        %v1866 = vpack.c.b16 %v1803, %v1794
        %v1867 = vpack.c.b16 %v1804, %v1795
        %v1868 = vpack.c.b16 %v1805, %v1796
        %v1869 = vpack.c.b16 %v1806, %v1797
        %v1870 = vpack.c.b16 %v1807, %v1798
        %v1871 = vpack.c.b16 %v1808, %v1799
        %v1872 = vpack.c.b16 %v1809, %v1800
        %v1873 = vpack.c.b16 %v1819, %v1810
        %v1874 = vpack.c.b16 %v1820, %v1811
        %v1875 = vpack.c.b16 %v1821, %v1812
        %v1876 = vpack.c.b16 %v1822, %v1813
        %v1877 = vpack.c.b16 %v1823, %v1814
        %v1878 = vpack.c.b16 %v1824, %v1815
        %v1879 = vpack.c.b16 %v1825, %v1816
        %v1880 = vpack.c.b16 %v1826, %v1817
        %v1881 = vpack.c.b16 %v1827, %v1818
        %v1882 = vpack.c.b16 %v1837, %v1828
        %v1883 = vpack.c.b16 %v1838, %v1829
        %v1884 = vpack.c.b16 %v1839, %v1830
        %v1885 = vpack.c.b16 %v1840, %v1831
        %v1886 = vpack.c.b16 %v1841, %v1832
        %v1887 = vpack.c.b16 %v1842, %v1833
        %v1888 = vpack.c.b16 %v1843, %v1834
        %v1889 = vpack.c.b16 %v1844, %v1835
        %v1890 = vpack.c.b16 %v1845, %v1836
        %v1891 = vpack.c.b16 %v1855, %v1846
        %v1892 = vpack.c.b16 %v1856, %v1847
        %v1893 = vpack.c.b16 %v1857, %v1848
        %v1894 = vpack.c.b16 %v1858, %v1849
        %v1895 = vpack.c.b16 %v1859, %v1850
        %v1896 = vpack.c.b16 %v1860, %v1851
        %v1897 = vpack.c.b16 %v1861, %v1852
        %v1898 = vpack.c.b16 %v1862, %v1853
        %v1899 = vpack.c.b16 %v1863, %v1854
        %v2080 = vunpack.c.l.b16 %v1601
        %v2081 = vunpack.c.l.b16 %v1602
        %v2082 = vunpack.c.l.b16 %v1603
        %v2083 = vunpack.c.l.b16 %v1604
        %v2084 = vunpack.c.l.b16 %v1605
        %v2085 = vunpack.c.l.b16 %v1606
        %v2086 = vunpack.c.l.b16 %v1607
        %v2087 = vunpack.c.l.b16 %v1608
        %v2088 = vunpack.c.l.b16 %v1609
        %v2089 = vunpack.c.l.b16 %v1610
        %v2090 = vunpack.c.l.b16 %v1611
        %v2091 = vunpack.c.l.b16 %v1612
        %v2092 = vunpack.c.l.b16 %v1613
        %v2093 = vunpack.c.l.b16 %v1614
        %v2094 = vunpack.c.l.b16 %v1615
        %v2095 = vunpack.c.l.b16 %v1616
        %v2096 = vunpack.c.l.b16 %v1617
        %v2097 = vunpack.c.l.b16 %v1618
        %v2098 = vunpack.c.l.b16 %v1619
        %v2099 = vunpack.c.l.b16 %v1620
        %v2100 = vunpack.c.l.b16 %v1621
        %v2101 = vunpack.c.l.b16 %v1622
        %v2102 = vunpack.c.l.b16 %v1623
        %v2103 = vunpack.c.l.b16 %v1624
        %v2104 = vunpack.c.l.b16 %v1625
        %v2105 = vunpack.c.l.b16 %v1626
        %v2106 = vunpack.c.l.b16 %v1627
        %v2107 = vunpack.c.l.b16 %v1628
        %v2108 = vunpack.c.l.b16 %v1629
        %v2109 = vunpack.c.l.b16 %v1630
        %v2110 = vunpack.c.l.b16 %v1631
        %v2111 = vunpack.c.l.b16 %v1632
        %v2112 = vunpack.c.l.b16 %v1633
        %v2113 = vunpack.c.l.b16 %v1634
        %v2114 = vunpack.c.l.b16 %v1635
        %v2115 = vunpack.c.l.b16 %v1636
        %v2116 = vunpack.c.l.b16 %v1637
        %v2117 = vunpack.c.l.b16 %v1638
        %v2118 = vunpack.c.l.b16 %v1639
        %v2119 = vunpack.c.l.b16 %v1640
        %v2120 = vunpack.c.l.b16 %v1641
        %v2121 = vunpack.c.l.b16 %v1642
        %v2122 = vunpack.c.l.b16 %v1643
        %v2123 = vunpack.c.l.b16 %v1644
        %v2124 = vunpack.c.l.b16 %v1645
        %v2125 = vunpack.c.l.b16 %v1646
        %v2126 = vunpack.c.l.b16 %v1647
        %v2127 = vunpack.c.l.b16 %v1648
        %v2128 = vunpack.c.l.b16 %v1649
        %v2129 = vunpack.c.l.b16 %v1650
        %v2130 = vunpack.c.l.b16 %v1651
        %v2131 = vunpack.c.l.b16 %v1652
        %v2132 = vunpack.c.l.b16 %v1653
        %v2133 = vunpack.c.l.b16 %v1654
        %v2134 = vunpack.c.l.b16 %v1655
        %v2135 = vunpack.c.l.b16 %v1656
        %v2136 = vunpack.c.l.b16 %v1657
        %v2137 = vunpack.c.l.b16 %v1658
        %v2138 = vunpack.c.l.b16 %v1659
        %v2139 = vunpack.c.l.b16 %v1660
        %v2140 = vunpack.c.l.b16 %v1661
        %v2141 = vunpack.c.l.b16 %v1662
        %v2142 = vunpack.c.l.b16 %v1663
        %v2143 = vunpack.c.l.b16 %v1664
        %v2144 = vunpack.c.l.b16 %v1665
        %v2145 = vunpack.c.l.b16 %v1666
        %v2146 = vunpack.c.l.b16 %v1667
        %v2147 = vunpack.c.l.b16 %v1668
        %v2148 = vunpack.c.l.b16 %v1669
        %v2149 = vunpack.c.l.b16 %v1670
        %v2150 = vunpack.c.l.b16 %v1671
        %v2151 = vunpack.c.l.b16 %v1672
        %v2152 = vunpack.c.l.b16 %v1673
        %v2153 = vunpack.c.l.b16 %v1674
        %v2154 = vunpack.c.l.b16 %v1675
        %v2155 = vunpack.c.l.b16 %v1676
        %v2156 = vunpack.c.l.b16 %v1677
        %v2157 = vunpack.c.l.b16 %v1678
        %v2158 = vunpack.c.l.b16 %v1679
        %v2159 = vunpack.c.l.b16 %v1680
        %v2160 = vunpack.c.l.b16 %v1681
        %v2161 = vunpack.c.l.b16 %v1682
        %v2162 = vunpack.c.l.b16 %v1683
        %v2163 = vunpack.c.l.b16 %v1684
        %v2164 = vunpack.c.l.b16 %v1685
        %v2165 = vunpack.c.l.b16 %v1686
        %v2166 = vunpack.c.l.b16 %v1687
        %v2167 = vunpack.c.l.b16 %v1688
        %v2168 = vunpack.c.l.b16 %v1689
        %v2169 = vunpack.c.l.b16 %v1690
        %v2170 = vunpack.c.l.b16 %v1691
        %v2171 = vunpack.c.l.b16 %v1692
        %v2172 = vunpack.c.l.b16 %v1693
        %v2173 = vunpack.c.l.b16 %v1694
        %v2174 = vunpack.c.l.b16 %v1695
        %v2175 = vunpack.c.l.b16 %v1696
        %v2176 = vunpack.c.l.b16 %v1697
        %v2177 = vunpack.c.l.b16 %v1698
        %v2178 = vunpack.c.l.b16 %v1699
        %v2179 = vunpack.c.l.b16 %v1700
        %v2180 = vunpack.c.l.b16 %v1701
        %v2181 = vunpack.c.l.b16 %v1702
        %v2182 = vunpack.c.l.b16 %v1703
        %v2183 = vunpack.c.l.b16 %v1704
        %v2184 = vunpack.c.l.b16 %v1705
        %v2185 = vunpack.c.l.b16 %v1706
        %v2186 = vunpack.c.l.b16 %v1707
        %v2187 = vunpack.c.l.b16 %v1708
        %v2188 = vunpack.c.l.b16 %v1709
        %v2189 = vunpack.c.l.b16 %v1710
        %v2190 = vunpack.c.l.b16 %v1711
        %v2191 = vunpack.c.l.b16 %v1712
        %v2192 = vunpack.c.l.b16 %v1713
        %v2193 = vunpack.c.l.b16 %v1714
        %v2194 = vunpack.c.l.b16 %v1715
        %v2195 = vunpack.c.l.b16 %v1716
        %v2196 = vunpack.c.l.b16 %v1717
        %v2197 = vunpack.c.l.b16 %v1718
        %v2198 = vunpack.c.l.b16 %v1719
        %v2199 = vunpack.c.l.b16 %v1720
        %v2200 = vunpack.c.l.b16 %v1721
        %v2201 = vunpack.c.l.b16 %v1722
        %v2202 = vunpack.c.l.b16 %v1723
        %v2203 = vunpack.c.l.b16 %v1724
        %v2204 = vunpack.c.l.b16 %v1725
        %v2205 = vunpack.c.l.b16 %v1726
        %v2206 = vunpack.c.l.b16 %v1727
        %v2207 = vunpack.c.l.b16 %v1728
        %v2208 = vunpack.c.l.b16 %v1729
        %v2209 = vunpack.c.l.b16 %v1730
        %v2210 = vunpack.c.l.b16 %v1731
        %v2211 = vunpack.c.l.b16 %v1732
        %v2212 = vunpack.c.l.b16 %v1733
        %v2213 = vunpack.c.l.b16 %v1734
        %v2214 = vunpack.c.l.b16 %v1735
        %v2215 = vunpack.c.l.b16 %v1736
        %v2216 = vunpack.c.l.b16 %v1737
        %v2217 = vunpack.c.l.b16 %v1738
        %v2218 = vunpack.c.l.b16 %v1739
        %v2219 = vunpack.c.l.b16 %v1740
        %v2220 = vunpack.c.l.b16 %v1741
        %v2221 = vunpack.c.l.b16 %v1742
        %v2222 = vunpack.c.l.b16 %v1743
        %v2223 = vunpack.c.l.b16 %v1744
        %v2224 = vpack.c.b16 %v2081, %v2080
        %v2225 = vpack.c.b16 %v2083, %v2082
        %v2226 = vpack.c.b16 %v2085, %v2084
        %v2227 = vpack.c.b16 %v2087, %v2086
        %v2228 = vpack.c.b16 %v2089, %v2088
        %v2229 = vpack.c.b16 %v2091, %v2090
        %v2230 = vpack.c.b16 %v2093, %v2092
        %v2231 = vpack.c.b16 %v2095, %v2094
        %v2232 = vpack.c.b16 %v2097, %v2096
        %v2233 = vpack.c.b16 %v2099, %v2098
        %v2234 = vpack.c.b16 %v2101, %v2100
        %v2235 = vpack.c.b16 %v2103, %v2102
        %v2236 = vpack.c.b16 %v2105, %v2104
        %v2237 = vpack.c.b16 %v2107, %v2106
        %v2238 = vpack.c.b16 %v2109, %v2108
        %v2239 = vpack.c.b16 %v2111, %v2110
        %v2240 = vpack.c.b16 %v2113, %v2112
        %v2241 = vpack.c.b16 %v2115, %v2114
        %v2242 = vpack.c.b16 %v2117, %v2116
        %v2243 = vpack.c.b16 %v2119, %v2118
        %v2244 = vpack.c.b16 %v2121, %v2120
        %v2245 = vpack.c.b16 %v2123, %v2122
        %v2246 = vpack.c.b16 %v2125, %v2124
        %v2247 = vpack.c.b16 %v2127, %v2126
        %v2248 = vpack.c.b16 %v2129, %v2128
        %v2249 = vpack.c.b16 %v2131, %v2130
        %v2250 = vpack.c.b16 %v2133, %v2132
        %v2251 = vpack.c.b16 %v2135, %v2134
        %v2252 = vpack.c.b16 %v2137, %v2136
        %v2253 = vpack.c.b16 %v2139, %v2138
        %v2254 = vpack.c.b16 %v2141, %v2140
        %v2255 = vpack.c.b16 %v2143, %v2142
        %v2256 = vpack.c.b16 %v2145, %v2144
        %v2257 = vpack.c.b16 %v2147, %v2146
        %v2258 = vpack.c.b16 %v2149, %v2148
        %v2259 = vpack.c.b16 %v2151, %v2150
        %v2260 = vpack.c.b16 %v2153, %v2152
        %v2261 = vpack.c.b16 %v2155, %v2154
        %v2262 = vpack.c.b16 %v2157, %v2156
        %v2263 = vpack.c.b16 %v2159, %v2158
        %v2264 = vpack.c.b16 %v2161, %v2160
        %v2265 = vpack.c.b16 %v2163, %v2162
        %v2266 = vpack.c.b16 %v2165, %v2164
        %v2267 = vpack.c.b16 %v2167, %v2166
        %v2268 = vpack.c.b16 %v2169, %v2168
        %v2269 = vpack.c.b16 %v2171, %v2170
        %v2270 = vpack.c.b16 %v2173, %v2172
        %v2271 = vpack.c.b16 %v2175, %v2174
        %v2272 = vpack.c.b16 %v2177, %v2176
        %v2273 = vpack.c.b16 %v2179, %v2178
        %v2274 = vpack.c.b16 %v2181, %v2180
        %v2275 = vpack.c.b16 %v2183, %v2182
        %v2276 = vpack.c.b16 %v2185, %v2184
        %v2277 = vpack.c.b16 %v2187, %v2186
        %v2278 = vpack.c.b16 %v2189, %v2188
        %v2279 = vpack.c.b16 %v2191, %v2190
        %v2280 = vpack.c.b16 %v2193, %v2192
        %v2281 = vpack.c.b16 %v2195, %v2194
        %v2282 = vpack.c.b16 %v2197, %v2196
        %v2283 = vpack.c.b16 %v2199, %v2198
        %v2284 = vpack.c.b16 %v2201, %v2200
        %v2285 = vpack.c.b16 %v2203, %v2202
        %v2286 = vpack.c.b16 %v2205, %v2204
        %v2287 = vpack.c.b16 %v2207, %v2206
        %v2288 = vpack.c.b16 %v2209, %v2208
        %v2289 = vpack.c.b16 %v2211, %v2210
        %v2290 = vpack.c.b16 %v2213, %v2212
        %v2291 = vpack.c.b16 %v2215, %v2214
        %v2292 = vpack.c.b16 %v2217, %v2216
        %v2293 = vpack.c.b16 %v2219, %v2218
        %v2294 = vpack.c.b16 %v2221, %v2220
        %v2295 = vpack.c.b16 %v2223, %v2222
        %2368 = vmatprep.subr.bf16.mxu0 0
        %2369 = vmatpush1.bf16.msra.mxu0 %v2231
        %2370 = vmatprep.subr.bf16.mxu0 0
        %2371 = vmatpush1.bf16.msra.mxu0 %v2230
        %2372 = vmatprep.subr.bf16.mxu0 0
        %2373 = vmatpush1.bf16.msra.mxu0 %v2229
        %2374 = vmatprep.subr.bf16.mxu0 0
        %2375 = vmatpush1.bf16.msra.mxu0 %v2228
        %2376 = vmatprep.subr.bf16.mxu0 0
        %2377 = vmatpush1.bf16.msra.mxu0 %v2227
        %2378 = vmatprep.subr.bf16.mxu0 0
        %2379 = vmatpush1.bf16.msra.mxu0 %v2226
        %2380 = vmatprep.subr.bf16.mxu0 0
        %2381 = vmatpush1.bf16.msra.mxu0 %v2225
        %2382 = vmatprep.subr.bf16.mxu0 0
        %2383 = vmatpush1.bf16.msra.mxu0 %v2224
        %2384 = vmatprep.subr.bf16.mxu0 0
        %2385 = vmatpush2.bf16.msra.mxu0 %v2239
        %2386 = vmatprep.subr.bf16.mxu0 0
        %2387 = vmatpush2.bf16.msra.mxu0 %v2238
        %2388 = vmatprep.subr.bf16.mxu0 0
        %2389 = vmatpush2.bf16.msra.mxu0 %v2237
        %2390 = vmatprep.subr.bf16.mxu0 0
        %2391 = vmatpush2.bf16.msra.mxu0 %v2236
        %2392 = vmatprep.subr.bf16.mxu0 0
        %2393 = vmatpush2.bf16.msra.mxu0 %v2235
        %2394 = vmatprep.subr.bf16.mxu0 0
        %2395 = vmatpush2.bf16.msra.mxu0 %v2234
        %2396 = vmatprep.subr.bf16.mxu0 0
        %2397 = vmatpush2.bf16.msra.mxu0 %v2233
        %2398 = vmatprep.subr.bf16.mxu0 0
        %2399 = vmatpush2.bf16.msra.mxu0 %v2232
        %2400 = vmatprep.mubr.bf16.mxu0 %v1865
        %2401 = vmatmul.mubr.bf16.gmra.mxu0 %v1864
        %v2402 = vpop.f32.mrf.mxu0
        %v2403 = vadd.f32 %v1750, %v2402
        %v2404 = vpop.f32.mrf.mxu0
        %v2405 = vpop.f32.mrf.mxu0
        %v2406 = vadd.f32 %v1750, %v2405
        %v2407 = vpop.f32.mrf.mxu0
        %2408 = vmatprep.mubr.bf16.mxu0 %v1874
        %2409 = vmatmul.mubr.bf16.gmra.mxu0 %v1873
        %v2410 = vpop.f32.mrf.mxu0
        %v2411 = vadd.f32 %v1750, %v2410
        %v2412 = vpop.f32.mrf.mxu0
        %v2413 = vpop.f32.mrf.mxu0
        %v2414 = vadd.f32 %v1750, %v2413
        %v2415 = vpop.f32.mrf.mxu0
        %2416 = vmatprep.mubr.bf16.mxu0 %v1883
        %2417 = vmatmul.mubr.bf16.gmra.mxu0 %v1882
        %v2418 = vpop.f32.mrf.mxu0
        %v2419 = vadd.f32 %v1750, %v2418
        %v2420 = vpop.f32.mrf.mxu0
        %v2421 = vpop.f32.mrf.mxu0
        %v2422 = vadd.f32 %v1750, %v2421
        %v2423 = vpop.f32.mrf.mxu0
        %2424 = vmatprep.mubr.bf16.mxu0 %v1892
        %2425 = vmatmul.mubr.bf16.gmra.mxu0 %v1891
        %v2426 = vpop.f32.mrf.mxu0
        %v2427 = vadd.f32 %v1750, %v2426
        %v2428 = vpop.f32.mrf.mxu0
        %v2429 = vpop.f32.mrf.mxu0
        %v2430 = vadd.f32 %v1750, %v2429
        %v2431 = vpop.f32.mrf.mxu0
        %2432 = vdwg.mxu0
        %2433 = vmatprep.subr.bf16.mxu0 0
        %2434 = vmatpush1.bf16.msra.mxu0 %v2247
        %2435 = vmatprep.subr.bf16.mxu0 0
        %2436 = vmatpush1.bf16.msra.mxu0 %v2246
        %2437 = vmatprep.subr.bf16.mxu0 0
        %2438 = vmatpush1.bf16.msra.mxu0 %v2245
        %2439 = vmatprep.subr.bf16.mxu0 0
        %2440 = vmatpush1.bf16.msra.mxu0 %v2244
        %2441 = vmatprep.subr.bf16.mxu0 0
        %2442 = vmatpush1.bf16.msra.mxu0 %v2243
        %2443 = vmatprep.subr.bf16.mxu0 0
        %2444 = vmatpush1.bf16.msra.mxu0 %v2242
        %2445 = vmatprep.subr.bf16.mxu0 0
        %2446 = vmatpush1.bf16.msra.mxu0 %v2241
        %2447 = vmatprep.subr.bf16.mxu0 0
        %2448 = vmatpush1.bf16.msra.mxu0 %v2240
        %2449 = vmatprep.subr.bf16.mxu0 0
        %2450 = vmatpush2.bf16.msra.mxu0 %v2255
        %2451 = vmatprep.subr.bf16.mxu0 0
        %2452 = vmatpush2.bf16.msra.mxu0 %v2254
        %2453 = vmatprep.subr.bf16.mxu0 0
        %2454 = vmatpush2.bf16.msra.mxu0 %v2253
        %2455 = vmatprep.subr.bf16.mxu0 0
        %2456 = vmatpush2.bf16.msra.mxu0 %v2252
        %2457 = vmatprep.subr.bf16.mxu0 0
        %2458 = vmatpush2.bf16.msra.mxu0 %v2251
        %2459 = vmatprep.subr.bf16.mxu0 0
        %2460 = vmatpush2.bf16.msra.mxu0 %v2250
        %2461 = vmatprep.subr.bf16.mxu0 0
        %2462 = vmatpush2.bf16.msra.mxu0 %v2249
        %2463 = vmatprep.subr.bf16.mxu0 0
        %2464 = vmatpush2.bf16.msra.mxu0 %v2248
        %2465 = vmatprep.mubr.bf16.mxu0 %v1867
        %2466 = vmatmul.mubr.bf16.gmra.mxu0 %v1866
        %v2467 = vpop.f32.mrf.mxu0
        %v2468 = vadd.f32 %v2403, %v2467
        %v2469 = vpop.f32.mrf.mxu0
        %v2470 = vpop.f32.mrf.mxu0
        %v2471 = vadd.f32 %v2406, %v2470
        %v2472 = vpop.f32.mrf.mxu0
        %2473 = vmatprep.mubr.bf16.mxu0 %v1876
        %2474 = vmatmul.mubr.bf16.gmra.mxu0 %v1875
        %v2475 = vpop.f32.mrf.mxu0
        %v2476 = vadd.f32 %v2411, %v2475
        %v2477 = vpop.f32.mrf.mxu0
        %v2478 = vpop.f32.mrf.mxu0
        %v2479 = vadd.f32 %v2414, %v2478
        %v2480 = vpop.f32.mrf.mxu0
        %2481 = vmatprep.mubr.bf16.mxu0 %v1885
        %2482 = vmatmul.mubr.bf16.gmra.mxu0 %v1884
        %v2483 = vpop.f32.mrf.mxu0
        %v2484 = vadd.f32 %v2419, %v2483
        %v2485 = vpop.f32.mrf.mxu0
        %v2486 = vpop.f32.mrf.mxu0
        %v2487 = vadd.f32 %v2422, %v2486
        %v2488 = vpop.f32.mrf.mxu0
        %2489 = vmatprep.mubr.bf16.mxu0 %v1894
        %2490 = vmatmul.mubr.bf16.gmra.mxu0 %v1893
        %v2491 = vpop.f32.mrf.mxu0
        %v2492 = vadd.f32 %v2427, %v2491
        %v2493 = vpop.f32.mrf.mxu0
        %v2494 = vpop.f32.mrf.mxu0
        %v2495 = vadd.f32 %v2430, %v2494
        %v2496 = vpop.f32.mrf.mxu0
        %2497 = vdwg.mxu0
        %2498 = vmatprep.subr.bf16.mxu0 0
        %2499 = vmatpush1.bf16.msra.mxu0 %v2263
        %2500 = vmatprep.subr.bf16.mxu0 0
        %2501 = vmatpush1.bf16.msra.mxu0 %v2262
        %2502 = vmatprep.subr.bf16.mxu0 0
        %2503 = vmatpush1.bf16.msra.mxu0 %v2261
        %2504 = vmatprep.subr.bf16.mxu0 0
        %2505 = vmatpush1.bf16.msra.mxu0 %v2260
        %2506 = vmatprep.subr.bf16.mxu0 0
        %2507 = vmatpush1.bf16.msra.mxu0 %v2259
        %2508 = vmatprep.subr.bf16.mxu0 0
        %2509 = vmatpush1.bf16.msra.mxu0 %v2258
        %2510 = vmatprep.subr.bf16.mxu0 0
        %2511 = vmatpush1.bf16.msra.mxu0 %v2257
        %2512 = vmatprep.subr.bf16.mxu0 0
        %2513 = vmatpush1.bf16.msra.mxu0 %v2256
        %2514 = vmatprep.subr.bf16.mxu0 0
        %2515 = vmatpush2.bf16.msra.mxu0 %v2271
        %2516 = vmatprep.subr.bf16.mxu0 0
        %2517 = vmatpush2.bf16.msra.mxu0 %v2270
        %2518 = vmatprep.subr.bf16.mxu0 0
        %2519 = vmatpush2.bf16.msra.mxu0 %v2269
        %2520 = vmatprep.subr.bf16.mxu0 0
        %2521 = vmatpush2.bf16.msra.mxu0 %v2268
        %2522 = vmatprep.subr.bf16.mxu0 0
        %2523 = vmatpush2.bf16.msra.mxu0 %v2267
        %2524 = vmatprep.subr.bf16.mxu0 0
        %2525 = vmatpush2.bf16.msra.mxu0 %v2266
        %2526 = vmatprep.subr.bf16.mxu0 0
        %2527 = vmatpush2.bf16.msra.mxu0 %v2265
        %2528 = vmatprep.subr.bf16.mxu0 0
        %2529 = vmatpush2.bf16.msra.mxu0 %v2264
        %2530 = vmatprep.mubr.bf16.mxu0 %v1869
        %2531 = vmatmul.mubr.bf16.gmra.mxu0 %v1868
        %v2532 = vpop.f32.mrf.mxu0
        %v2533 = vadd.f32 %v2468, %v2532
        %v2534 = vpop.f32.mrf.mxu0
        %v2535 = vpop.f32.mrf.mxu0
        %v2536 = vadd.f32 %v2471, %v2535
        %v2537 = vpop.f32.mrf.mxu0
        %2538 = vmatprep.mubr.bf16.mxu0 %v1878
        %2539 = vmatmul.mubr.bf16.gmra.mxu0 %v1877
        %v2540 = vpop.f32.mrf.mxu0
        %v2541 = vadd.f32 %v2476, %v2540
        %v2542 = vpop.f32.mrf.mxu0
        %v2543 = vpop.f32.mrf.mxu0
        %v2544 = vadd.f32 %v2479, %v2543
        %v2545 = vpop.f32.mrf.mxu0
        %2546 = vmatprep.mubr.bf16.mxu0 %v1887
        %2547 = vmatmul.mubr.bf16.gmra.mxu0 %v1886
        %v2548 = vpop.f32.mrf.mxu0
        %v2549 = vadd.f32 %v2484, %v2548
        %v2550 = vpop.f32.mrf.mxu0
        %v2551 = vpop.f32.mrf.mxu0
        %v2552 = vadd.f32 %v2487, %v2551
        %v2553 = vpop.f32.mrf.mxu0
        %2554 = vmatprep.mubr.bf16.mxu0 %v1896
        %2555 = vmatmul.mubr.bf16.gmra.mxu0 %v1895
        %v2556 = vpop.f32.mrf.mxu0
        %v2557 = vadd.f32 %v2492, %v2556
        %v2558 = vpop.f32.mrf.mxu0
        %v2559 = vpop.f32.mrf.mxu0
        %v2560 = vadd.f32 %v2495, %v2559
        %v2561 = vpop.f32.mrf.mxu0
        %2562 = vdwg.mxu0
        %2563 = vmatprep.subr.bf16.mxu0 0
        %2564 = vmatpush1.bf16.msra.mxu0 %v2279
        %2565 = vmatprep.subr.bf16.mxu0 0
        %2566 = vmatpush1.bf16.msra.mxu0 %v2278
        %2567 = vmatprep.subr.bf16.mxu0 0
        %2568 = vmatpush1.bf16.msra.mxu0 %v2277
        %2569 = vmatprep.subr.bf16.mxu0 0
        %2570 = vmatpush1.bf16.msra.mxu0 %v2276
        %2571 = vmatprep.subr.bf16.mxu0 0
        %2572 = vmatpush1.bf16.msra.mxu0 %v2275
        %2573 = vmatprep.subr.bf16.mxu0 0
        %2574 = vmatpush1.bf16.msra.mxu0 %v2274
        %2575 = vmatprep.subr.bf16.mxu0 0
        %2576 = vmatpush1.bf16.msra.mxu0 %v2273
        %2577 = vmatprep.subr.bf16.mxu0 0
        %2578 = vmatpush1.bf16.msra.mxu0 %v2272
        %2579 = vmatprep.subr.bf16.mxu0 0
        %2580 = vmatpush2.bf16.msra.mxu0 %v2287
        %2581 = vmatprep.subr.bf16.mxu0 0
        %2582 = vmatpush2.bf16.msra.mxu0 %v2286
        %2583 = vmatprep.subr.bf16.mxu0 0
        %2584 = vmatpush2.bf16.msra.mxu0 %v2285
        %2585 = vmatprep.subr.bf16.mxu0 0
        %2586 = vmatpush2.bf16.msra.mxu0 %v2284
        %2587 = vmatprep.subr.bf16.mxu0 0
        %2588 = vmatpush2.bf16.msra.mxu0 %v2283
        %2589 = vmatprep.subr.bf16.mxu0 0
        %2590 = vmatpush2.bf16.msra.mxu0 %v2282
        %2591 = vmatprep.subr.bf16.mxu0 0
        %2592 = vmatpush2.bf16.msra.mxu0 %v2281
        %2593 = vmatprep.subr.bf16.mxu0 0
        %2594 = vmatpush2.bf16.msra.mxu0 %v2280
        %2595 = vmatprep.mubr.bf16.mxu0 %v1871
        %2596 = vmatmul.mubr.bf16.gmra.mxu0 %v1870
        %v2597 = vpop.f32.mrf.mxu0
        %v2598 = vadd.f32 %v2533, %v2597
        %v2599 = vpop.f32.mrf.mxu0
        %v2600 = vpop.f32.mrf.mxu0
        %v2601 = vadd.f32 %v2536, %v2600
        %v2602 = vpop.f32.mrf.mxu0
        %2603 = vmatprep.mubr.bf16.mxu0 %v1880
        %2604 = vmatmul.mubr.bf16.gmra.mxu0 %v1879
        %v2605 = vpop.f32.mrf.mxu0
        %v2606 = vadd.f32 %v2541, %v2605
        %v2607 = vpop.f32.mrf.mxu0
        %v2608 = vpop.f32.mrf.mxu0
        %v2609 = vadd.f32 %v2544, %v2608
        %v2610 = vpop.f32.mrf.mxu0
        %2611 = vmatprep.mubr.bf16.mxu0 %v1889
        %2612 = vmatmul.mubr.bf16.gmra.mxu0 %v1888
        %v2613 = vpop.f32.mrf.mxu0
        %v2614 = vadd.f32 %v2549, %v2613
        %v2615 = vpop.f32.mrf.mxu0
        %v2616 = vpop.f32.mrf.mxu0
        %v2617 = vadd.f32 %v2552, %v2616
        %v2618 = vpop.f32.mrf.mxu0
        %2619 = vmatprep.mubr.bf16.mxu0 %v1898
        %2620 = vmatmul.mubr.bf16.gmra.mxu0 %v1897
        %v2621 = vpop.f32.mrf.mxu0
        %v2622 = vadd.f32 %v2557, %v2621
        %v2623 = vpop.f32.mrf.mxu0
        %v2624 = vpop.f32.mrf.mxu0
        %v2625 = vadd.f32 %v2560, %v2624
        %v2626 = vpop.f32.mrf.mxu0
        %2627 = vdwg.mxu0
        %2628 = vmatprep.subr.bf16.mxu0 0
        %2629 = vmatpush1.bf16.msra.mxu0 %v2295
        %2630 = vmatprep.subr.bf16.mxu0 0
        %2631 = vmatpush1.bf16.msra.mxu0 %v2294
        %2632 = vmatprep.subr.bf16.mxu0 0
        %2633 = vmatpush1.bf16.msra.mxu0 %v2293
        %2634 = vmatprep.subr.bf16.mxu0 0
        %2635 = vmatpush1.bf16.msra.mxu0 %v2292
        %2636 = vmatprep.subr.bf16.mxu0 0
        %2637 = vmatpush1.bf16.msra.mxu0 %v2291
        %2638 = vmatprep.subr.bf16.mxu0 0
        %2639 = vmatpush1.bf16.msra.mxu0 %v2290
        %2640 = vmatprep.subr.bf16.mxu0 0
        %2641 = vmatpush1.bf16.msra.mxu0 %v2289
        %2642 = vmatprep.subr.bf16.mxu0 0
        %2643 = vmatpush1.bf16.msra.mxu0 %v2288
        %2644 = vmatprep.subr.bf16.mxu0 0
        %2645 = vmatpush2.bf16.msra.mxu0 0
        %2646 = vmatprep.subr.bf16.mxu0 0
        %2647 = vmatpush2.bf16.msra.mxu0 0
        %2648 = vmatprep.subr.bf16.mxu0 0
        %2649 = vmatpush2.bf16.msra.mxu0 0
        %2650 = vmatprep.subr.bf16.mxu0 0
        %2651 = vmatpush2.bf16.msra.mxu0 0
        %2652 = vmatprep.subr.bf16.mxu0 0
        %2653 = vmatpush2.bf16.msra.mxu0 0
        %2654 = vmatprep.subr.bf16.mxu0 0
        %2655 = vmatpush2.bf16.msra.mxu0 0
        %2656 = vmatprep.subr.bf16.mxu0 0
        %2657 = vmatpush2.bf16.msra.mxu0 0
        %2658 = vmatprep.subr.bf16.mxu0 0
        %2659 = vmatpush2.bf16.msra.mxu0 0
        %2660 = vmatprep.mubr.bf16.mxu0 0
        %2661 = vmatmul.mubr.bf16.gmra.mxu0 %v1872
        %v2662 = vpop.f32.mrf.mxu0
        %v2663 = vadd.f32 %v2598, %v2662
        %v2664 = vpop.f32.mrf.mxu0
        %v2665 = vpop.f32.mrf.mxu0
        %v2666 = vadd.f32 %v2601, %v2665
        %v2667 = vpop.f32.mrf.mxu0
        %2668 = vmatprep.mubr.bf16.mxu0 0
        %2669 = vmatmul.mubr.bf16.gmra.mxu0 %v1881
        %v2670 = vpop.f32.mrf.mxu0
        %v2671 = vadd.f32 %v2606, %v2670
        %v2672 = vpop.f32.mrf.mxu0
        %v2673 = vpop.f32.mrf.mxu0
        %v2674 = vadd.f32 %v2609, %v2673
        %v2675 = vpop.f32.mrf.mxu0
        %2676 = vmatprep.mubr.bf16.mxu0 0
        %2677 = vmatmul.mubr.bf16.gmra.mxu0 %v1890
        %v2678 = vpop.f32.mrf.mxu0
        %v2679 = vadd.f32 %v2614, %v2678
        %v2680 = vpop.f32.mrf.mxu0
        %v2681 = vpop.f32.mrf.mxu0
        %v2682 = vadd.f32 %v2617, %v2681
        %v2683 = vpop.f32.mrf.mxu0
        %2684 = vmatprep.mubr.bf16.mxu0 0
        %2685 = vmatmul.mubr.bf16.gmra.mxu0 %v1899
        %v2686 = vpop.f32.mrf.mxu0
        %v2687 = vadd.f32 %v2622, %v2686
        %v2688 = vpop.f32.mrf.mxu0
        %v2689 = vpop.f32.mrf.mxu0
        %v2690 = vadd.f32 %v2625, %v2689
        %v2691 = vpop.f32.mrf.mxu0
        %2692 = vdwg.mxu0
        %v2693 = vmax.f32 %v2663, 0.0
        %v2694 = vmax.f32 %v2666, 0.0
        %v2695 = vmax.f32 %v2671, 0.0
        %v2696 = vmax.f32 %v2674, 0.0
        %v2697 = vmax.f32 %v2679, 0.0
        %v2698 = vmax.f32 %v2682, 0.0
        %v2699 = vmax.f32 %v2687, 0.0
        %v2700 = vmax.f32 %v2690, 0.0
        %v2701 = vpack.c.bf16 %v2694, %v2693
        %v2702 = vpack.c.bf16 %v2696, %v2695
        %v2703 = vpack.c.bf16 %v2698, %v2697
        %v2704 = vpack.c.bf16 %v2700, %v2699
        %v2705 = vld [vmem:[%s5] sm:$0xf]
        %v2706 = vld [vmem:[%s5 + $0x4] sm:$0xf]
        %v2707 = vld [vmem:[%s5 + $0x8] sm:$0xf]
        %v2708 = vld [vmem:[%s5 + $0xc] sm:$0xf]
        %v2709 = vld [vmem:[%s5 + $0x10] sm:$0xf]
        %v2710 = vld [vmem:[%s5 + $0x14] sm:$0xf]
        %v2711 = vld [vmem:[%s5 + $0x18] sm:$0xf]
        %v2712 = vld [vmem:[%s5 + $0x1c] sm:$0xf]
        %v2713 = vld [vmem:[%s5 + $0x20] sm:$0xf]
        %v2714 = vld [vmem:[%s5 + $0x24] sm:$0xf]
        %v2715 = vld [vmem:[%s5 + $0x28] sm:$0xf]
        %v2716 = vld [vmem:[%s5 + $0x2c] sm:$0xf]
        %v2717 = vld [vmem:[%s5 + $0x30] sm:$0xf]
        %v2718 = vld [vmem:[%s5 + $0x34] sm:$0xf]
        %v2719 = vld [vmem:[%s5 + $0x38] sm:$0xf]
        %v2720 = vld [vmem:[%s5 + $0x3c] sm:$0xf]
        %v2721 = vld [vmem:[%s6] sm:$0x1]
        %v2723 = vlaneseq
        %v2724 = vshrl.u32 %v2723, 7
        %v2725 = vsub.s32 0, %v2724
        %v2726 = vrot.slane %v2721, %v2725
        %v2744 = vunpack.c.l.b16 %v2705
        %v2745 = vunpack.c.l.b16 %v2706
        %v2746 = vunpack.c.l.b16 %v2707
        %v2747 = vunpack.c.l.b16 %v2708
        %v2748 = vunpack.c.l.b16 %v2709
        %v2749 = vunpack.c.l.b16 %v2710
        %v2750 = vunpack.c.l.b16 %v2711
        %v2751 = vunpack.c.l.b16 %v2712
        %v2752 = vunpack.c.l.b16 %v2713
        %v2753 = vunpack.c.l.b16 %v2714
        %v2754 = vunpack.c.l.b16 %v2715
        %v2755 = vunpack.c.l.b16 %v2716
        %v2756 = vunpack.c.l.b16 %v2717
        %v2757 = vunpack.c.l.b16 %v2718
        %v2758 = vunpack.c.l.b16 %v2719
        %v2759 = vunpack.c.l.b16 %v2720
        %v2760 = vpack.c.b16 %v2745, %v2744
        %v2761 = vpack.c.b16 %v2747, %v2746
        %v2762 = vpack.c.b16 %v2749, %v2748
        %v2763 = vpack.c.b16 %v2751, %v2750
        %v2764 = vpack.c.b16 %v2753, %v2752
        %v2765 = vpack.c.b16 %v2755, %v2754
        %v2766 = vpack.c.b16 %v2757, %v2756
        %v2767 = vpack.c.b16 %v2759, %v2758
        %2776 = vmatprep.subr.bf16.mxu0 0
        %2777 = vmatpush1.bf16.msra.mxu0 %v2767
        %2778 = vmatprep.subr.bf16.mxu0 0
        %2779 = vmatpush1.bf16.msra.mxu0 %v2766
        %2780 = vmatprep.subr.bf16.mxu0 0
        %2781 = vmatpush1.bf16.msra.mxu0 %v2765
        %2782 = vmatprep.subr.bf16.mxu0 0
        %2783 = vmatpush1.bf16.msra.mxu0 %v2764
        %2784 = vmatprep.subr.bf16.mxu0 0
        %2785 = vmatpush1.bf16.msra.mxu0 %v2763
        %2786 = vmatprep.subr.bf16.mxu0 0
        %2787 = vmatpush1.bf16.msra.mxu0 %v2762
        %2788 = vmatprep.subr.bf16.mxu0 0
        %2789 = vmatpush1.bf16.msra.mxu0 %v2761
        %2790 = vmatprep.subr.bf16.mxu0 0
        %2791 = vmatpush1.bf16.msra.mxu0 %v2760
        %2792 = vmatprep.subr.bf16.mxu0 0
        %2793 = vmatpush2.bf16.msra.mxu0 0
        %2794 = vmatprep.subr.bf16.mxu0 0
        %2795 = vmatpush2.bf16.msra.mxu0 0
        %2796 = vmatprep.subr.bf16.mxu0 0
        %2797 = vmatpush2.bf16.msra.mxu0 0
        %2798 = vmatprep.subr.bf16.mxu0 0
        %2799 = vmatpush2.bf16.msra.mxu0 0
        %2800 = vmatprep.subr.bf16.mxu0 0
        %2801 = vmatpush2.bf16.msra.mxu0 0
        %2802 = vmatprep.subr.bf16.mxu0 0
        %2803 = vmatpush2.bf16.msra.mxu0 0
        %2804 = vmatprep.subr.bf16.mxu0 0
        %2805 = vmatpush2.bf16.msra.mxu0 0
        %2806 = vmatprep.subr.bf16.mxu0 0
        %2807 = vmatpush2.bf16.msra.mxu0 0
        %2808 = vmatprep.mubr.bf16.mxu0 0
        %2809 = vmatmul.mubr.bf16.gmra.mxu0 %v2701
        %v2810 = vpop.f32.mrf.mxu0
        %v2811 = vadd.f32 %v2726, %v2810
        %v2812 = vpop.f32.mrf.mxu0
        %v2813 = vpop.f32.mrf.mxu0
        %v2814 = vadd.f32 %v2726, %v2813
        %v2815 = vpop.f32.mrf.mxu0
        %2816 = vmatprep.mubr.bf16.mxu0 0
        %2817 = vmatmul.mubr.bf16.gmra.mxu0 %v2702
        %v2818 = vpop.f32.mrf.mxu0
        %v2819 = vadd.f32 %v2726, %v2818
        %v2820 = vpop.f32.mrf.mxu0
        %v2821 = vpop.f32.mrf.mxu0
        %v2822 = vadd.f32 %v2726, %v2821
        %v2823 = vpop.f32.mrf.mxu0
        %2824 = vmatprep.mubr.bf16.mxu0 0
        %2825 = vmatmul.mubr.bf16.gmra.mxu0 %v2703
        %v2826 = vpop.f32.mrf.mxu0
        %v2827 = vadd.f32 %v2726, %v2826
        %v2828 = vpop.f32.mrf.mxu0
        %v2829 = vpop.f32.mrf.mxu0
        %v2830 = vadd.f32 %v2726, %v2829
        %v2831 = vpop.f32.mrf.mxu0
        %2832 = vmatprep.mubr.bf16.mxu0 0
        %2833 = vmatmul.mubr.bf16.gmra.mxu0 %v2704
        %v2834 = vpop.f32.mrf.mxu0
        %v2835 = vadd.f32 %v2726, %v2834
        %v2836 = vpop.f32.mrf.mxu0
        %v2837 = vpop.f32.mrf.mxu0
        %v2838 = vadd.f32 %v2726, %v2837
        %v2839 = vpop.f32.mrf.mxu0
        %2840 = vdwg.mxu0
        %v2841 = vunpack.c.l.bf16 %v301
        %v2842 = vunpack.c.l.bf16 %v302
        %v2843 = vunpack.c.l.bf16 %v303
        %v2844 = vunpack.c.l.bf16 %v304
        %v2845 = vunpack.c.l.bf16 %v305
        %v2846 = vunpack.c.l.bf16 %v306
        %v2847 = vunpack.c.l.bf16 %v307
        %v2848 = vunpack.c.l.bf16 %v308
        %v2849 = vadd.f32 %v2811, %v2841
        %v2850 = vadd.f32 %v2814, %v2842
        %v2851 = vadd.f32 %v2819, %v2843
        %v2852 = vadd.f32 %v2822, %v2844
        %v2853 = vadd.f32 %v2827, %v2845
        %v2854 = vadd.f32 %v2830, %v2846
        %v2855 = vadd.f32 %v2835, %v2847
        %v2856 = vadd.f32 %v2838, %v2848
        %v2857 = vmax.f32 %v2849, 0.0
        %v2858 = vmax.f32 %v2850, 0.0
        %v2859 = vmax.f32 %v2851, 0.0
        %v2860 = vmax.f32 %v2852, 0.0
        %v2861 = vmax.f32 %v2853, 0.0
        %v2862 = vmax.f32 %v2854, 0.0
        %v2863 = vmax.f32 %v2855, 0.0
        %v2864 = vmax.f32 %v2856, 0.0
        %v2865 = vpack.c.bf16 %v2858, %v2857
        %v2866 = vpack.c.bf16 %v2860, %v2859
        %v2867 = vpack.c.bf16 %v2862, %v2861
        %v2868 = vpack.c.bf16 %v2864, %v2863
        %v2873 = vunpack.c.l.b16 %v2865
        %v2874 = vunpack.c.h.b16 %v2865
        %v2875 = vunpack.c.l.b16 %v2866
        %v2876 = vunpack.c.h.b16 %v2866
        %v2877 = vunpack.c.l.b16 %v2867
        %v2878 = vunpack.c.h.b16 %v2867
        %v2879 = vunpack.c.l.b16 %v2868
        %v2880 = vunpack.c.h.b16 %v2868
        %v2881 = vpack.c.b16 %v2873, %v2873
        %v2882 = vpack.c.b16 %v2874, %v2874
        %v2883 = vpack.c.b16 %v2875, %v2875
        %v2884 = vpack.c.b16 %v2876, %v2876
        %v2885 = vpack.c.b16 %v2877, %v2877
        %v2886 = vpack.c.b16 %v2878, %v2878
        %v2887 = vpack.c.b16 %v2879, %v2879
        %v2888 = vpack.c.b16 %v2880, %v2880
        %vm2897 = vcmask 125952
        %2898 = vst.msk [vmem:[%s293] sm:$0xf] %vm2897, %v2881
        %2899 = vst.msk [vmem:[%s293 + $0x4] sm:$0xf] %vm2897, %v2882
        %2900 = vst.msk [vmem:[%s293 + $0x8] sm:$0xf] %vm2897, %v2883
        %2901 = vst.msk [vmem:[%s293 + $0xc] sm:$0xf] %vm2897, %v2884
        %2902 = vst.msk [vmem:[%s293 + $0x10] sm:$0xf] %vm2897, %v2885
        %2903 = vst.msk [vmem:[%s293 + $0x14] sm:$0xf] %vm2897, %v2886
        %2904 = vst.msk [vmem:[%s293 + $0x18] sm:$0xf] %vm2897, %v2887
        %2905 = vst.msk [vmem:[%s293 + $0x1c] sm:$0xf] %vm2897, %v2888
        %p2906 = scmp.lt.s32.totalorder %s19, 1
        %s2907 = scalar_select %p2906, %s19, 1
        %s2908 = smul.addr %s2907, 8
        %s2909 = smul.addr %s2908, 4
        %s2910 = scalar_lea.vmem %s7, %s2909
        // Predicated region
        $region53: #{tpu_custom_call.1} parent=47 // pred_check
          %p2911 = pneg %p189
        $region54: #{tpu_custom_call.1} parent=47 // pred_check_branch
          %2913 = sbr.rel (%p2911) target = $region56
        $region55: #{tpu_custom_call.1} parent=47 // pred_region
          _
        $region56: #{tpu_custom_call.1} parent=47 // pred_fallthru
          _
      $region48: #{tpu_custom_call.1} parent=5 // pred_fallthru
        _
      %p2914 = scmp.le.s32.totalorder 2, %s14
      // Predicated region
      $region57: #{tpu_custom_call.1} parent=5 // pred_check
        %p2915 = pneg %p2914
      $region58: #{tpu_custom_call.1} parent=5 // pred_check_branch
        %2917 = sbr.rel (%p2915) target = $region60
      $region59: #{tpu_custom_call.1} parent=5 // pred_region
        %s2918 = ssub.s32 %s14, 2
        // Predicated region
        $region61: #{tpu_custom_call.1} parent=59 // pred_check
          %p2919 = pneg %p195
        $region62: #{tpu_custom_call.1} parent=59 // pred_check_branch
          %2921 = sbr.rel (%p2919) target = $region64
        $region63: #{tpu_custom_call.1} parent=59 // pred_region
          %p2922 = scmp.lt.s32.totalorder %s20, 1
          %s2923 = scalar_select %p2922, %s20, 1
          %s2924 = smul.addr %s2923, 8
          %s2925 = smul.addr %s2924, 4
          %s2926 = scalar_lea.vmem %s7, %s2925
        $region64: #{tpu_custom_call.1} parent=59 // pred_fallthru
          _
      $region60: #{tpu_custom_call.1} parent=5 // pred_fallthru
        _
    $region6: #{tpu_custom_call.1} parent=1 // loop_footer
      %s18 = sadd.s32 1, %s14
    $region7: #{tpu_custom_call.1} parent=1 // loop_footer_branch
      %13 = sbr.rel target = $region3
    $region8: #{tpu_custom_call.1} parent=1 // loop_exit
      _
    %2927 = vsyncpa [#allocation5], 1
    %s2928 = scalar_lea.sflag [#allocation5], 1
    %2929 = vsyncpa %s2928, 1

</llo_original>
